<compile_context>
chip_gen: v6e
topology: v6e:2x2x1
jax: 0.10.0
libtpu: 0.0.40
codegen_flags: <defaults>
</compile_context>

<pallas_src>
import functools

import jax
import jax.numpy as jnp
from jax.experimental import pallas as pl
from jax.experimental.pallas import tpu as pltpu

# TODO(synk): the pretrained transformer (self.plm) forward itself is not translated;
# its first/last hidden states are supplied as inputs to the Pallas head kernel.


def head_kernel(hid_ref, segs_l_ref, segs_r_ref, w_ref, b_ref, out_ref,
                acc_ref, *, inv_seq_len, embed_dim):
    f32 = jnp.float32
    bf16 = jnp.bfloat16
    si = pl.program_id(1)
    n_s = pl.num_programs(1)

    # ---- init accumulator on the first S tile of each batch tile ----
    @pl.when(si == 0)
    def _():
        acc_ref[...] = jnp.zeros_like(acc_ref)

    # ---- streaming phase: build masks, one MXU contraction per step ----
    segs_l = segs_l_ref[...]                                  # (Bt, St) int32
    segs_r = segs_r_ref[...]
    bt, st = segs_l.shape
    ones = jnp.ones((bt, 1, st), bf16)
    tar_l = (segs_l == 1).astype(bf16)[:, None, :]            # target mask (left)
    tar_r = (segs_r == 1).astype(bf16)[:, None, :]            # target mask (right)
    pos_r = (segs_r == 3).astype(bf16)[:, None, :]            # POS mask    (right)
    masks = jnp.concatenate([ones, tar_l, tar_r, pos_r], axis=1)   # (Bt, 4, St)

    # Packed hidden tile: lanes = [first_l | first_r | last_l | last_r] (bf16).
    # Products mask(0/1) * bf16 are exact; accumulation is f32 (MXU + scratch).
    acc_ref[...] += jnp.einsum('bks,bsd->bkd', masks, hid_ref[...],
                               preferred_element_type=f32)

    # ---- finalize on the last S tile ----
    @pl.when(si == n_s - 1)
    def _():
        D = embed_dim
        acc = acc_ref[...]                                    # (Bt, 4, 4D) f32
        # first_last_avg + torch.mean(dim=1): divide by full S (not mask count).
        half_inv = 0.5 * inv_seq_len
        left = (acc[:, :, 0:D] + acc[:, :, 2 * D:3 * D]) * half_inv    # left sent.
        right = (acc[:, :, D:2 * D] + acc[:, :, 3 * D:4 * D]) * half_inv
        h_c = left[:, 0, :]        # mean(embed_l)
        h_t = left[:, 1, :]        # mean(tar_l * embed_l)
        h_b = right[:, 2, :]       # mean(tar_r * embed_r)
        h_p = right[:, 3, :]       # mean(pos_r * embed_r)

        # cat_abs_dot features for MIP/SPV, plus h_p; MIP/SPV/fc are folded into
        # a single (9D, c_pad) weight -> one lane-dense matmul.
        feat = jnp.concatenate(
            [h_t, h_b, jnp.abs(h_t - h_b), h_t * h_b,
             h_c, h_t, jnp.abs(h_c - h_t), h_c * h_t,
             h_p], axis=-1)                                   # (Bt, 9D)
        out_ref[...] = jnp.dot(feat, w_ref[...],
                               preferred_element_type=f32) + b_ref[...]


def pack_hidden(first_l, last_l, first_r, last_r):
    """Pack the four (B, S, D) hidden streams into one lane-dense (B, S, 4D) array.

    TODO(synk): ideally the PLM epilogue emits this layout directly so the pack does
    not cost an extra HBM pass outside the kernel.
    """
    return jnp.concatenate([first_l, first_r, last_l, last_r], axis=-1)


def fold_params(params, num_classes):
    """One-time parameter prep: fold MIP_linear, SPV_linear and fc into a single
    (9D, c_pad) weight and (1, c_pad) bias (lane-padded to 128 output lanes)."""
    D = params["w_mip"].shape[1]
    C = num_classes
    c_pad = ((C + 127) // 128) * 128
    w_fc, b_fc = params["w_fc"], params["b_fc"]
    w_fc_mip = w_fc[0:D, :]            # (D, C)
    w_fc_spv = w_fc[D:2 * D, :]
    w_fc_pos = w_fc[2 * D:3 * D, :]
    w_folded = jnp.concatenate(
        [params["w_mip"] @ w_fc_mip,   # (4D, C)
         params["w_spv"] @ w_fc_spv,   # (4D, C)
         w_fc_pos], axis=0)            # (D,  C)  -> (9D, C)
    b_folded = params["b_mip"] @ w_fc_mip + params["b_spv"] @ w_fc_spv + b_fc
    w_p = jnp.zeros((9 * D, c_pad), jnp.float32).at[:, :C].set(w_folded)
    b_p = jnp.zeros((1, c_pad), jnp.float32).at[:, :C].set(b_folded)
    return {"w": w_p, "b": b_p, "embed_dim": D, "num_classes": C}


def model_head(hidden_packed, segs_ls, segs_rs, folded, *, b_tile=None, s_tile=None):
    """Post-PLM head. `hidden_packed` is (B, S, 4D) bf16/f32; accumulation is f32."""
    B, S, D4 = hidden_packed.shape
    D = folded["embed_dim"]
    C = folded["num_classes"]
    c_pad = folded["w"].shape[1]
    assert D4 == 4 * D and folded["w"].shape[0] == 9 * D

    if b_tile is None:
        # >= 2 batch grid steps so dimension_semantics=("parallel",...) can shard
        # across the two TensorCores on v7x; fall back to full B if unsplittable.
        b_tile = B // 2 if (B % 2 == 0 and (B // 2) % 8 == 0) else B
    if s_tile is None:
        # This head is pure HBM streaming: biggest tile that fits VMEM wins.
        # Full S here; for long sequences pick a multiple-of-128 divisor of S that
        # keeps each packed block around 0.5-4 MiB (x2 pipeline buffers).
        s_tile = S

    assert B % b_tile == 0 and S % s_tile == 0
    assert b_tile == B or b_tile % 8 == 0
    assert s_tile == S or s_tile % 128 == 0   # lane/sublane alignment for seg+hid blocks

    grid = (B // b_tile, S // s_tile)

    segs_l = segs_ls.astype(jnp.int32)
    segs_r = segs_rs.astype(jnp.int32)

    hid_spec = pl.BlockSpec((b_tile, s_tile, D4), lambda bi, si: (bi, si, 0))
    seg_spec = pl.BlockSpec((b_tile, s_tile), lambda bi, si: (bi, si))
    w_spec = pl.BlockSpec(folded["w"].shape, lambda bi, si: (0, 0))
    b_spec = pl.BlockSpec(folded["b"].shape, lambda bi, si: (0, 0))
    out_spec = pl.BlockSpec((b_tile, c_pad), lambda bi, si: (bi, 0))

    # Per-generation VMEM budget: double-buffered streams + resident weights +
    # scratch + output, capped at 48 MiB so the plan also fits v7x's 64 MiB VMEM
    # (v5e/v6e have 128 MiB physical, so this is conservative there too).
    hid_block = b_tile * s_tile * D4 * hidden_packed.dtype.itemsize
    seg_block = b_tile * s_tile * 4
    need = 2 * (hid_block + 2 * seg_block)
    need += folded["w"].nbytes + folded["b"].nbytes
    need += b_tile * c_pad * 4 + b_tile * 4 * 128 * 4
    vmem_limit = int(min(48 << 20, max(32 << 20, 2 * need)))

    kernel = functools.partial(head_kernel, inv_seq_len=1.0 / float(S), embed_dim=D)

    out_padded = pl.pallas_call(
        kernel,
        out_shape=jax.ShapeDtypeStruct((B, c_pad), jnp.float32),
        grid_spec=pltpu.PrefetchScalarGridSpec(
            num_scalar_prefetch=0,
            grid=grid,
            in_specs=[hid_spec, seg_spec, seg_spec, w_spec, b_spec],
            out_specs=out_spec,
            scratch_shapes=[pltpu.VMEM((b_tile, 4, D4), jnp.float32)],
        ),
        compiler_params=pltpu.CompilerParams(
            dimension_semantics=("parallel", "arbitrary"),
            vmem_limit_bytes=vmem_limit,
        ),
    )(hidden_packed, segs_l, segs_r, folded["w"], folded["b"])

    return out_padded[:, :C]


def init_params(key, embed_dim, num_classes, initializer_range=0.02):
    k1, k2, k3 = jax.random.split(key, 3)
    # PyTorch nn.Linear weight is (out, in); stored transposed (in, out) for x @ W.
    w_mip = initializer_range * jax.random.normal(k1, (4 * embed_dim, embed_dim), jnp.float32)
    w_spv = initializer_range * jax.random.normal(k2, (4 * embed_dim, embed_dim), jnp.float32)
    w_fc = initializer_range * jax.random.normal(k3, (3 * embed_dim, num_classes), jnp.float32)
    return {
        "w_mip": w_mip, "b_mip": jnp.zeros((1, embed_dim), jnp.float32),
        "w_spv": w_spv, "b_spv": jnp.zeros((1, embed_dim), jnp.float32),
        "w_fc": w_fc, "b_fc": jnp.zeros((1, num_classes), jnp.float32),
    }


def reference_head(first_l, last_l, first_r, last_r, segs_ls, segs_rs, p):
    f32 = jnp.float32
    embed_l = (first_l.astype(f32) + last_l.astype(f32)) / 2.0
    embed_r = (first_r.astype(f32) + last_r.astype(f32)) / 2.0
    tar_l = (segs_ls == 1).astype(f32)[:, :, None]
    tar_r = (segs_rs == 1).astype(f32)[:, :, None]
    pos_r = (segs_rs == 3).astype(f32)[:, :, None]
    h_c = jnp.mean(embed_l, axis=1)
    h_t = jnp.mean(tar_l * embed_l, axis=1)
    h_b = jnp.mean(tar_r * embed_r, axis=1)
    h_p = jnp.mean(pos_r * embed_r, axis=1)
    h_mip = jnp.concatenate([h_t, h_b, jnp.abs(h_t - h_b), h_t * h_b], -1) @ p["w_mip"] + p["b_mip"]
    h_spv = jnp.concatenate([h_c, h_t, jnp.abs(h_c - h_t), h_c * h_t], -1) @ p["w_spv"] + p["b_spv"]
    final = jnp.concatenate([h_mip, h_spv, h_p], -1)
    return final @ p["w_fc"] + p["b_fc"]


if __name__ == "__main__":
    # Small but tiling-exercising shapes: defaults give grid = (B/(B/2), S/S) = (2, 1),
    # i.e. two "parallel" batch steps (both v7x TensorCores busy) and full-S blocks.
    B, S, D, C = 16, 32, 32, 4

    key = jax.random.PRNGKey(0)
    k_hid, k_par, k_seg = jax.random.split(key, 3)
    kh = jax.random.split(k_hid, 4)
    ks = jax.random.split(k_seg, 2)

    # Synthetic PLM hidden states (stand-ins for plm(...).hidden_states[1] / [-1]),
    # supplied in bf16 to halve the HBM streaming bytes of the head.
    first_l = jax.random.normal(kh[0], (B, S, D), jnp.float32).astype(jnp.bfloat16)
    last_l = jax.random.normal(kh[1], (B, S, D), jnp.float32).astype(jnp.bfloat16)
    first_r = jax.random.normal(kh[2], (B, S, D), jnp.float32).astype(jnp.bfloat16)
    last_r = jax.random.normal(kh[3], (B, S, D), jnp.float32).astype(jnp.bfloat16)

    # Segment ids: left in {0,1} (context/target), right in {0..3} (3 = POS).
    segs_ls = jax.random.randint(ks[0], (B, S), 0, 2, dtype=jnp.int32)
    segs_rs = jax.random.randint(ks[1], (B, S), 0, 4, dtype=jnp.int32)

    params = init_params(k_par, D, C)
    folded = fold_params(params, C)                      # one-time param prep
    hidden_packed = pack_hidden(first_l, last_l, first_r, last_r)  # (B, S, 128) bf16

    out = model_head(hidden_packed, segs_ls, segs_rs, folded)
    out = jax.block_until_ready(out)

    ref = reference_head(first_l, last_l, first_r, last_r, segs_ls, segs_rs, params)
    assert out.shape == (B, C)
    assert jnp.allclose(out, ref, atol=1e-4, rtol=1e-4), "mismatch vs JAX reference"

    print("KERNEL_OK")
</pallas_src>

<mosaic_0001>
module attributes {stable_mosaic.version = 11 : i64} {
  func.func @head_kernel(%arg0: i32, %arg1: i32, %arg2: memref<8x32x128xbf16, #tpu.memory_space<vmem>>, %arg3: memref<8x32xi32, #tpu.memory_space<vmem>>, %arg4: memref<8x32xi32, #tpu.memory_space<vmem>>, %arg5: memref<288x128xf32, #tpu.memory_space<vmem>>, %arg6: memref<1x128xf32, #tpu.memory_space<vmem>>, %arg7: memref<8x128xf32, #tpu.memory_space<vmem>>, %arg8: memref<8x4x128xf32, #tpu.memory_space<vmem>>) attributes {dimension_semantics = [#tpu.dimension_semantics<parallel>, #tpu.dimension_semantics<arbitrary>], iteration_bounds = array<i64: 2, 1>, scalar_prefetch = 0 : i64, scratch_operands = 1 : i64, tpu.core_type = #tpu.core_type<tc>, window_params = [{transform_indices = @transform_0, window_bounds = array<i64: 8, 32, 128>}, {transform_indices = @transform_1, window_bounds = array<i64: 8, 32>}, {transform_indices = @transform_2, window_bounds = array<i64: 8, 32>}, {pipeline_mode = #tpu.pipeline_mode<synchronous>, transform_indices = @transform_3, window_bounds = array<i64: 288, 128>}, {pipeline_mode = #tpu.pipeline_mode<synchronous>, transform_indices = @transform_4, window_bounds = array<i64: 1, 128>}, {transform_indices = @transform_5, window_bounds = array<i64: 8, 128>}]} {
    %c0_i32 = arith.constant 0 : i32
    %0 = arith.cmpi eq, %arg1, %c0_i32 : i32
    %1 = arith.extui %0 : i1 to i32
    %c0_i32_0 = arith.constant 0 : i32
    %2 = arith.cmpi ne, %1, %c0_i32_0 : i32
    scf.if %2 {
      %cst_17 = arith.constant 0.000000e+00 : f32
      %33 = vector.broadcast %cst_17 : f32 to vector<8x4x128xf32>
      %c0_18 = arith.constant 0 : index
      %c0_19 = arith.constant 0 : index
      %c0_20 = arith.constant 0 : index
      %34 = vector.load %arg8[%c0_18, %c0_19, %c0_20] : memref<8x4x128xf32, #tpu.memory_space<vmem>>, vector<8x4x128xf32>
      tpu.vector_store %arg8[%c0_18, %c0_19, %c0_20], %33 {strides = array<i32>} : memref<8x4x128xf32, #tpu.memory_space<vmem>>, vector<8x4x128xf32>,
    } else {
    }
    %c0 = arith.constant 0 : index
    %c0_1 = arith.constant 0 : index
    %3 = vector.load %arg3[%c0, %c0_1] : memref<8x32xi32, #tpu.memory_space<vmem>>, vector<8x32xi32>
    %c0_2 = arith.constant 0 : index
    %c0_3 = arith.constant 0 : index
    %4 = vector.load %arg4[%c0_2, %c0_3] : memref<8x32xi32, #tpu.memory_space<vmem>>, vector<8x32xi32>
    %cst = arith.constant 1.000000e+00 : bf16
    %5 = vector.broadcast %cst : bf16 to vector<8x1x32xbf16>
    %c1_i32 = arith.constant 1 : i32
    %6 = vector.broadcast %c1_i32 : i32 to vector<8x32xi32>
    %7 = arith.cmpi eq, %3, %6 : vector<8x32xi32>
    %8 = arith.extui %7 : vector<8x32xi1> to vector<8x32xi32>
    %9 = arith.sitofp %8 : vector<8x32xi32> to vector<8x32xf32>
    %10 = arith.truncf %9 : vector<8x32xf32> to vector<8x32xbf16>
    %11 = vector.shape_cast %10 : vector<8x32xbf16> to vector<8x1x32xbf16>
    %c1_i32_4 = arith.constant 1 : i32
    %12 = vector.broadcast %c1_i32_4 : i32 to vector<8x32xi32>
    %13 = arith.cmpi eq, %4, %12 : vector<8x32xi32>
    %14 = arith.extui %13 : vector<8x32xi1> to vector<8x32xi32>
    %15 = arith.sitofp %14 : vector<8x32xi32> to vector<8x32xf32>
    %16 = arith.truncf %15 : vector<8x32xf32> to vector<8x32xbf16>
    %17 = vector.shape_cast %16 : vector<8x32xbf16> to vector<8x1x32xbf16>
    %c3_i32 = arith.constant 3 : i32
    %18 = vector.broadcast %c3_i32 : i32 to vector<8x32xi32>
    %19 = arith.cmpi eq, %4, %18 : vector<8x32xi32>
    %20 = arith.extui %19 : vector<8x32xi1> to vector<8x32xi32>
    %21 = arith.sitofp %20 : vector<8x32xi32> to vector<8x32xf32>
    %22 = arith.truncf %21 : vector<8x32xf32> to vector<8x32xbf16>
    %23 = vector.shape_cast %22 : vector<8x32xbf16> to vector<8x1x32xbf16>
    %24 = tpu.concatenate %5, %11, %17, %23 in 1 : vector<8x1x32xbf16>, vector<8x1x32xbf16>, vector<8x1x32xbf16>, vector<8x1x32xbf16> -> vector<8x4x32xbf16>
    %c0_5 = arith.constant 0 : index
    %c0_6 = arith.constant 0 : index
    %c0_7 = arith.constant 0 : index
    %25 = vector.load %arg8[%c0_5, %c0_6, %c0_7] : memref<8x4x128xf32, #tpu.memory_space<vmem>>, vector<8x4x128xf32>
    %c0_8 = arith.constant 0 : index
    %c0_9 = arith.constant 0 : index
    %c0_10 = arith.constant 0 : index
    %26 = vector.load %arg2[%c0_8, %c0_9, %c0_10] : memref<8x32x128xbf16, #tpu.memory_space<vmem>>, vector<8x32x128xbf16>
    "tpu.trace_start"() <{level = 10 : i32, message = "bks,bsd->bkd"}> : () -> ()
    %cst_11 = arith.constant dense<0.000000e+00> : vector<8x4x128xf32>
    %27 = tpu.matmul %24, %26, %cst_11 {dimension_numbers = #tpu.dot_dimension_numbers<[2], [1], [1], [2], [0, 0, 0, 1, 1, 2], [0], [0]>} : vector<8x4x32xbf16>, vector<8x32x128xbf16>, vector<8x4x128xf32> -> vector<8x4x128xf32>
    "tpu.trace_stop"() : () -> ()
    %28 = arith.addf %25, %27 : vector<8x4x128xf32>
    %c0_12 = arith.constant 0 : index
    %c0_13 = arith.constant 0 : index
    %c0_14 = arith.constant 0 : index
    %29 = vector.load %arg8[%c0_12, %c0_13, %c0_14] : memref<8x4x128xf32, #tpu.memory_space<vmem>>, vector<8x4x128xf32>
    tpu.vector_store %arg8[%c0_12, %c0_13, %c0_14], %28 {strides = array<i32>} : memref<8x4x128xf32, #tpu.memory_space<vmem>>, vector<8x4x128xf32>,
    %c0_i32_15 = arith.constant 0 : i32
    %30 = arith.cmpi eq, %arg1, %c0_i32_15 : i32
    %31 = arith.extui %30 : i1 to i32
    %c0_i32_16 = arith.constant 0 : i32
    %32 = arith.cmpi ne, %31, %c0_i32_16 : i32
    scf.if %32 {
      %c0_17 = arith.constant 0 : index
      %c0_18 = arith.constant 0 : index
      %c0_19 = arith.constant 0 : index
      %33 = vector.load %arg8[%c0_17, %c0_18, %c0_19] : memref<8x4x128xf32, #tpu.memory_space<vmem>>, vector<8x4x128xf32>
      %34 = vector.extract_strided_slice %33 {offsets = [0, 0, 0], sizes = [8, 4, 32], strides = [1, 1, 1]} : vector<8x4x128xf32> to vector<8x4x32xf32>
      %35 = vector.extract_strided_slice %33 {offsets = [0, 0, 64], sizes = [8, 4, 32], strides = [1, 1, 1]} : vector<8x4x128xf32> to vector<8x4x32xf32>
      %36 = arith.addf %34, %35 : vector<8x4x32xf32>
      %cst_20 = arith.constant 1.562500e-02 : f32
      %37 = vector.broadcast %cst_20 : f32 to vector<8x4x32xf32>
      %38 = arith.mulf %36, %37 : vector<8x4x32xf32>
      %39 = vector.extract_strided_slice %33 {offsets = [0, 0, 32], sizes = [8, 4, 32], strides = [1, 1, 1]} : vector<8x4x128xf32> to vector<8x4x32xf32>
      %40 = vector.extract_strided_slice %33 {offsets = [0, 0, 96], sizes = [8, 4, 32], strides = [1, 1, 1]} : vector<8x4x128xf32> to vector<8x4x32xf32>
      %41 = arith.addf %39, %40 : vector<8x4x32xf32>
      %cst_21 = arith.constant 1.562500e-02 : f32
      %42 = vector.broadcast %cst_21 : f32 to vector<8x4x32xf32>
      %43 = arith.mulf %41, %42 : vector<8x4x32xf32>
      %44 = vector.extract_strided_slice %38 {offsets = [0, 0, 0], sizes = [8, 1, 32], strides = [1, 1, 1]} : vector<8x4x32xf32> to vector<8x1x32xf32>
      %45 = vector.shape_cast %44 : vector<8x1x32xf32> to vector<8x32xf32>
      %46 = vector.extract_strided_slice %38 {offsets = [0, 1, 0], sizes = [8, 1, 32], strides = [1, 1, 1]} : vector<8x4x32xf32> to vector<8x1x32xf32>
      %47 = vector.shape_cast %46 : vector<8x1x32xf32> to vector<8x32xf32>
      %48 = vector.extract_strided_slice %43 {offsets = [0, 2, 0], sizes = [8, 1, 32], strides = [1, 1, 1]} : vector<8x4x32xf32> to vector<8x1x32xf32>
      %49 = vector.shape_cast %48 : vector<8x1x32xf32> to vector<8x32xf32>
      %50 = vector.extract_strided_slice %43 {offsets = [0, 3, 0], sizes = [8, 1, 32], strides = [1, 1, 1]} : vector<8x4x32xf32> to vector<8x1x32xf32>
      %51 = vector.shape_cast %50 : vector<8x1x32xf32> to vector<8x32xf32>
      %52 = arith.subf %47, %49 : vector<8x32xf32>
      %53 = math.absf %52 : vector<8x32xf32>
      %54 = arith.mulf %47, %49 : vector<8x32xf32>
      %55 = arith.subf %45, %47 : vector<8x32xf32>
      %56 = math.absf %55 : vector<8x32xf32>
      %57 = arith.mulf %45, %47 : vector<8x32xf32>
      %58 = tpu.concatenate %47, %49, %53, %54, %45, %47, %56, %57, %51 in 1 : vector<8x32xf32>, vector<8x32xf32>, vector<8x32xf32>, vector<8x32xf32>, vector<8x32xf32>, vector<8x32xf32>, vector<8x32xf32>, vector<8x32xf32>, vector<8x32xf32> -> vector<8x288xf32>
      %c0_22 = arith.constant 0 : index
      %c0_23 = arith.constant 0 : index
      %59 = vector.load %arg5[%c0_22, %c0_23] : memref<288x128xf32, #tpu.memory_space<vmem>>, vector<288x128xf32>
      %cst_24 = arith.constant dense<0.000000e+00> : vector<8x128xf32>
      %60 = tpu.matmul %58, %59, %cst_24 {dimension_numbers = #tpu.dot_dimension_numbers<[1], [0], [0], [1], [0, 0, 1, 1], [], []>} : vector<8x288xf32>, vector<288x128xf32>, vector<8x128xf32> -> vector<8x128xf32>
      %c0_25 = arith.constant 0 : index
      %c0_26 = arith.constant 0 : index
      %61 = vector.load %arg6[%c0_25, %c0_26] : memref<1x128xf32, #tpu.memory_space<vmem>>, vector<1x128xf32>
      %62 = vector.broadcast %61 : vector<1x128xf32> to vector<8x128xf32>
      %63 = arith.addf %60, %62 : vector<8x128xf32>
      %c0_27 = arith.constant 0 : index
      %c0_28 = arith.constant 0 : index
      %64 = vector.load %arg7[%c0_27, %c0_28] : memref<8x128xf32, #tpu.memory_space<vmem>>, vector<8x128xf32>
      tpu.vector_store %arg7[%c0_27, %c0_28], %63 {strides = array<i32>} : memref<8x128xf32, #tpu.memory_space<vmem>>, vector<8x128xf32>,
    } else {
    }
    return
  }
  func.func @transform_0(%arg0: i32, %arg1: i32) -> (i32, i32, i32) {
    %c0_i32 = arith.constant 0 : i32
    %c0_i32_0 = arith.constant 0 : i32
    return %arg0, %arg1, %c0_i32 : i32, i32, i32
  }
  func.func @transform_1(%arg0: i32, %arg1: i32) -> (i32, i32) {
    %c0_i32 = arith.constant 0 : i32
    return %arg0, %arg1 : i32, i32
  }
  func.func @transform_2(%arg0: i32, %arg1: i32) -> (i32, i32) {
    %c0_i32 = arith.constant 0 : i32
    return %arg0, %arg1 : i32, i32
  }
  func.func @transform_3(%arg0: i32, %arg1: i32) -> (i32, i32) {
    %c0_i32 = arith.constant 0 : i32
    %c0_i32_0 = arith.constant 0 : i32
    %c0_i32_1 = arith.constant 0 : i32
    return %c0_i32, %c0_i32_0 : i32, i32
  }
  func.func @transform_4(%arg0: i32, %arg1: i32) -> (i32, i32) {
    %c0_i32 = arith.constant 0 : i32
    %c0_i32_0 = arith.constant 0 : i32
    %c0_i32_1 = arith.constant 0 : i32
    return %c0_i32, %c0_i32_0 : i32, i32
  }
  func.func @transform_5(%arg0: i32, %arg1: i32) -> (i32, i32) {
    %c0_i32 = arith.constant 0 : i32
    %c0_i32_0 = arith.constant 0 : i32
    return %arg0, %c0_i32 : i32, i32
  }
}

</mosaic_0001>

<llo_original>
// kernel: tpu_custom_call.1
$region0: #{tpu_custom_call.1}
  #allocation0 [shape = 'u32[]', space=smem, size = 0x4, offset = 0x4, fixed_abs, tag = 'smem constant byte address 0x4 - core index']
  #allocation1 [shape = 'u32[144,128]{1,0:T(1,128)}', space=vmem, size = 0x12000, scoped, tag = 'internal scratch']
  #allocation2 [shape = 'f32[8,4,128]{2,1,0:T(4,128)}', space=vmem, size = 0x4000, scoped, tag = 'scratch operand']
  %s0 = inlined_call_operand.hbm [shape: bf16[16,32,128], index: 0, kind: input, shape index: {}]
  %s1 = inlined_call_operand.hbm [shape: s32[16,32], index: 1, kind: input, shape index: {}]
  %s2 = inlined_call_operand.hbm [shape: s32[16,32], index: 2, kind: input, shape index: {}]
  %s3 = inlined_call_operand.hbm [shape: f32[288,128], index: 3, kind: input, shape index: {}]
  %s4 = inlined_call_operand.vmem [shape: f32[1,128], index: 4, kind: input, shape index: {}]
  %s5 = inlined_call_operand.hbm [shape: f32[16,128], index: 5, kind: output, shape index: {}]
  %s6 = sld [smem:[#allocation0]]
  $region77: #{tpu_custom_call.1} parent=0
    _
  %s8 = ssub.s32 1, %s6
  %s9 = scalar_select 0, %s8, %s6
  $region1: #{tpu_custom_call.1} parent=0
    #allocation3 [shape = 'u8[131072]{0}', space=vmem, size = 0x20000, scoped, tag = 'input window, operand 0']
    #allocation4 [shape = 's32[2]{0}', space=sflag, size = 0x8, scoped, tag = 'scoped memory for tpu_custom_call.1']
    #allocation5 [shape = 's32[2]{0}', space=sflag, size = 0x8, scoped, tag = 'scoped memory for tpu_custom_call.1']
    #allocation6 [shape = 'u8[8192]{0}', space=vmem, size = 0x2000, scoped, tag = 'input window, operand 1']
    #allocation7 [shape = 's32[2]{0}', space=sflag, size = 0x8, scoped, tag = 'scoped memory for tpu_custom_call.1']
    #allocation8 [shape = 'u8[8192]{0}', space=vmem, size = 0x2000, scoped, tag = 'input window, operand 2']
    #allocation9 [shape = 'u8[147456]{0}', space=vmem, size = 0x24000, scoped, tag = 'input window, operand 3, single buffered']
    #allocation10 [shape = 's32[1]{0}', space=sflag, size = 0x4, scoped, tag = 'scoped memory for tpu_custom_call.1']
    #allocation11 [shape = 'u8[8192]{0}', space=vmem, size = 0x2000, scoped, tag = 'output window, operand 0']
    %10 = vsyncpa [#allocation4], 0
    %s11 = scalar_lea.sflag [#allocation4], 1
    %12 = vsyncpa %s11, 0
    %13 = vsyncpa [#allocation7], 0
    %s14 = scalar_lea.sflag [#allocation7], 1
    %15 = vsyncpa %s14, 0
    %16 = vsyncpa [#allocation10], 0
    %17 = vsyncpa [#allocation5], 0
    %s18 = scalar_lea.sflag [#allocation5], 1
    %19 = vsyncpa %s18, 0
    loop: start=0, step=1, limit=4
    $region2: #{tpu_custom_call.1} parent=1 // loop_pre_header
      _
    $region3: #{tpu_custom_call.1} parent=1 // loop_header
      %s21 = sphi 0, %s25
      %p22 = scmp.ge.s32.totalorder %s21, 4
      %s28 = sphi 0, %s40
      %s29 = sphi 0, %s36
      %s30 = sphi 0, %s28
      %s31 = sphi 0, %s29
      %s32 = sphi 0, %s30
      %s33 = sphi 0, %s31
      %s45 = sphi 0, %s47
      %s48 = sphi 0, %s45
      %s49 = sphi 0, %s48
      %s65 = sphi 0, %s49
      %s73 = sphi 0, %s75
      %s76 = sphi 0, %s73
      %s77 = sphi 0, %s76
      %s93 = sphi 0, %s77
      %s101 = sphi 0, %s103
      %s104 = sphi 0, %s101
      %s105 = sphi 0, %s104
      %s121 = sphi 0, %s105
      %s125 = sphi 0, %s125
      %s127 = sphi 0, %s125
      %s128 = sphi 0, %s127
      %s142 = sphi 0, %s128
      %s146 = sphi 0, %s146
      %s148 = sphi 0, %s146
      %s149 = sphi 0, %s148
      %s163 = sphi 0, %s149
      %s169 = sphi 0, %s171
      %s172 = sphi 0, %s169
      %s173 = sphi 0, %s172
      %s189 = sphi 0, %s173
    $region4: #{tpu_custom_call.1} parent=1 // loop_header_branch
      %24 = sbr.rel (%p22) target = $region8
    $region5: #{tpu_custom_call.1} parent=1 // loop_body
      %s26 = ssub.s32 %s21, 1
      %s27 = ssub.s32 %s21, 2
      %s34 = sadd.s32 1, %s29
      %p35 = scmp.ge.s32.totalorder %s34, 1
      %s36 = scalar_select %p35, 0, %s34
      %s37 = sadd.s32 1, %s28
      %s38 = scalar_select %p35, %s37, %s28
      %p39 = scmp.ge.s32.totalorder %s38, 2
      %s40 = scalar_select %p39, 0, %s38
      %s41 = ssub.s32 %s28, %s40
      %s42 = ssub.s32 %s29, %s36
      %s43 = sor.u32 %s41, %s42
      %p44 = scmp.eq.s32.totalorder %s43, 0
      %s46 = sadd.s32 %s45, 1
      %s47 = scalar_select %p44, %s45, %s46
      %p50 = pneg %p44
      %p51 = scmp.eq.s32.totalorder %s21, 1
      %p52 = por %p50, %p51
      %p53 = scmp.ne.s32.totalorder %s45, %s48
      %p54 = scmp.eq.s32.totalorder %s21, 0
      %p55 = por %p53, %p54
      %p56 = scmp.ne.s32.totalorder %s45, %s48
      %p57 = scmp.eq.s32.totalorder %s26, 1
      %p58 = por %p56, %p57
      %p59 = scmp.ne.s32.totalorder %s48, %s49
      %p60 = scmp.eq.s32.totalorder %s26, 0
      %p61 = por %p59, %p60
      %p62 = scmp.ne.s32.totalorder %s48, %s49
      %p63 = scmp.eq.s32.totalorder %s27, 1
      %p64 = por %p62, %p63
      %p66 = scmp.ne.s32.totalorder %s49, %s65
      %p67 = scmp.eq.s32.totalorder %s27, 0
      %p68 = por %p66, %p67
      %s69 = ssub.s32 %s28, %s40
      %s70 = ssub.s32 %s29, %s36
      %s71 = sor.u32 %s69, %s70
      %p72 = scmp.eq.s32.totalorder %s71, 0
      %s74 = sadd.s32 %s73, 1
      %s75 = scalar_select %p72, %s73, %s74
      %p78 = pneg %p72
      %p79 = scmp.eq.s32.totalorder %s21, 1
      %p80 = por %p78, %p79
      %p81 = scmp.ne.s32.totalorder %s73, %s76
      %p82 = scmp.eq.s32.totalorder %s21, 0
      %p83 = por %p81, %p82
      %p84 = scmp.ne.s32.totalorder %s73, %s76
      %p85 = scmp.eq.s32.totalorder %s26, 1
      %p86 = por %p84, %p85
      %p87 = scmp.ne.s32.totalorder %s76, %s77
      %p88 = scmp.eq.s32.totalorder %s26, 0
      %p89 = por %p87, %p88
      %p90 = scmp.ne.s32.totalorder %s76, %s77
      %p91 = scmp.eq.s32.totalorder %s27, 1
      %p92 = por %p90, %p91
      %p94 = scmp.ne.s32.totalorder %s77, %s93
      %p95 = scmp.eq.s32.totalorder %s27, 0
      %p96 = por %p94, %p95
      %s97 = ssub.s32 %s28, %s40
      %s98 = ssub.s32 %s29, %s36
      %s99 = sor.u32 %s97, %s98
      %p100 = scmp.eq.s32.totalorder %s99, 0
      %s102 = sadd.s32 %s101, 1
      %s103 = scalar_select %p100, %s101, %s102
      %p106 = pneg %p100
      %p107 = scmp.eq.s32.totalorder %s21, 1
      %p108 = por %p106, %p107
      %p109 = scmp.ne.s32.totalorder %s101, %s104
      %p110 = scmp.eq.s32.totalorder %s21, 0
      %p111 = por %p109, %p110
      %p112 = scmp.ne.s32.totalorder %s101, %s104
      %p113 = scmp.eq.s32.totalorder %s26, 1
      %p114 = por %p112, %p113
      %p115 = scmp.ne.s32.totalorder %s104, %s105
      %p116 = scmp.eq.s32.totalorder %s26, 0
      %p117 = por %p115, %p116
      %p118 = scmp.ne.s32.totalorder %s104, %s105
      %p119 = scmp.eq.s32.totalorder %s27, 1
      %p120 = por %p118, %p119
      %p122 = scmp.ne.s32.totalorder %s105, %s121
      %p123 = scmp.eq.s32.totalorder %s27, 0
      %p124 = por %p122, %p123
      %s126 = sadd.s32 %s125, 1
      %p129 = scmp.eq.s32.totalorder %s21, 1
      %p130 = scmp.ne.s32.totalorder %s125, %s127
      %p131 = scmp.eq.s32.totalorder %s21, 0
      %p132 = por %p130, %p131
      %p133 = scmp.ne.s32.totalorder %s125, %s127
      %p134 = scmp.eq.s32.totalorder %s26, 1
      %p135 = por %p133, %p134
      %p136 = scmp.ne.s32.totalorder %s127, %s128
      %p137 = scmp.eq.s32.totalorder %s26, 0
      %p138 = por %p136, %p137
      %p139 = scmp.ne.s32.totalorder %s127, %s128
      %p140 = scmp.eq.s32.totalorder %s27, 1
      %p141 = por %p139, %p140
      %p143 = scmp.ne.s32.totalorder %s128, %s142
      %p144 = scmp.eq.s32.totalorder %s27, 0
      %p145 = por %p143, %p144
      %s147 = sadd.s32 %s146, 1
      %p150 = scmp.eq.s32.totalorder %s21, 1
      %p151 = scmp.ne.s32.totalorder %s146, %s148
      %p152 = scmp.eq.s32.totalorder %s21, 0
      %p153 = por %p151, %p152
      %p154 = scmp.ne.s32.totalorder %s146, %s148
      %p155 = scmp.eq.s32.totalorder %s26, 1
      %p156 = por %p154, %p155
      %p157 = scmp.ne.s32.totalorder %s148, %s149
      %p158 = scmp.eq.s32.totalorder %s26, 0
      %p159 = por %p157, %p158
      %p160 = scmp.ne.s32.totalorder %s148, %s149
      %p161 = scmp.eq.s32.totalorder %s27, 1
      %p162 = por %p160, %p161
      %p164 = scmp.ne.s32.totalorder %s149, %s163
      %p165 = scmp.eq.s32.totalorder %s27, 0
      %p166 = por %p164, %p165
      %s167 = ssub.s32 %s28, %s40
      %p168 = scmp.eq.s32.totalorder %s167, 0
      %s170 = sadd.s32 %s169, 1
      %s171 = scalar_select %p168, %s169, %s170
      %p174 = pneg %p168
      %p175 = scmp.eq.s32.totalorder %s21, 1
      %p176 = por %p174, %p175
      %p177 = scmp.ne.s32.totalorder %s169, %s172
      %p178 = scmp.eq.s32.totalorder %s21, 0
      %p179 = por %p177, %p178
      %p180 = scmp.ne.s32.totalorder %s169, %s172
      %p181 = scmp.eq.s32.totalorder %s26, 1
      %p182 = por %p180, %p181
      %p183 = scmp.ne.s32.totalorder %s172, %s173
      %p184 = scmp.eq.s32.totalorder %s26, 0
      %p185 = por %p183, %p184
      %p186 = scmp.ne.s32.totalorder %s172, %s173
      %p187 = scmp.eq.s32.totalorder %s27, 1
      %p188 = por %p186, %p187
      %p190 = scmp.ne.s32.totalorder %s173, %s189
      %p191 = scmp.eq.s32.totalorder %s27, 0
      %p192 = por %p190, %p191
      %p193 = scmp.le.s32.totalorder 1, %s21
      %p194 = scmp.lt.s32.totalorder %s21, 3
      %p195 = pnand %p193, %p194
      %p196 = pneg %p195
      // Predicated region
      $region9: #{tpu_custom_call.1} parent=5 // pred_check
        _
      $region10: #{tpu_custom_call.1} parent=5 // pred_check_branch
        %198 = sbr.rel (%p195) target = $region12
      $region11: #{tpu_custom_call.1} parent=5 // pred_region
        %s199 = ssub.s32 %s21, 1
        // Predicated region
        $region13: #{tpu_custom_call.1} parent=11 // pred_check
          %p200 = pneg %p138
        $region14: #{tpu_custom_call.1} parent=11 // pred_check_branch
          %202 = sbr.rel (%p200) target = $region16
        $region15: #{tpu_custom_call.1} parent=11 // pred_region
          %s204 = ssub.s32 4608, 4608
          %205 = vsyncadd [#allocation10], %s204
          %s206 = sshll.u32 [#allocation9], 4
          %s207 = int_to_ptr.vmem [resolvable:$true] %s206
          %212 = dma.hbm_to_vmem [thread:$0]  %s3, 4608, %s207, [#allocation10], 128, 128, 8
        $region16: #{tpu_custom_call.1} parent=11 // pred_fallthru
          _
        // Predicated region
        $region17: #{tpu_custom_call.1} parent=11 // pred_check
          %p213 = pneg %p159
        $region18: #{tpu_custom_call.1} parent=11 // pred_check_branch
          %215 = sbr.rel (%p213) target = $region20
        $region19: #{tpu_custom_call.1} parent=11 // pred_region
          _
        $region20: #{tpu_custom_call.1} parent=11 // pred_fallthru
          _
      $region12: #{tpu_custom_call.1} parent=5 // pred_fallthru
        _
      %p216 = scmp.lt.s32.totalorder %s21, 2
      // Predicated region
      $region21: #{tpu_custom_call.1} parent=5 // pred_check
        %p217 = pneg %p216
      $region22: #{tpu_custom_call.1} parent=5 // pred_check_branch
        %219 = sbr.rel (%p217) target = $region24
      $region23: #{tpu_custom_call.1} parent=5 // pred_region
        // Predicated region
        $region25: #{tpu_custom_call.1} parent=23 // pred_check
          %p220 = pneg %p55
        $region26: #{tpu_custom_call.1} parent=23 // pred_check_branch
          %222 = sbr.rel (%p220) target = $region28
        $region27: #{tpu_custom_call.1} parent=23 // pred_region
          %s223 = sand.u32 %s45, 1
          %s224 = scalar_lea.sflag [#allocation4], %s223
          %s225 = sand.u32 %s45, 1
          %s226 = smul.addr %s225, 128
          %s227 = scalar_lea.vmem [#allocation3], %s226
          %s228 = smul.u32 8, %s28
          %s229 = smul.u32 4, %s29
          %s231 = ssub.s32 2048, 2048
          %232 = vsyncadd %s224, %s231
          %s233 = smul.addr %s228, 4
          %s234 = sadd.s32 %s229, %s233
          %s235 = smul.addr %s234, 64
          %s236 = scalar_lea.hbm %s0, %s235
          %s237 = sshll.u32 %s227, 4
          %s238 = int_to_ptr.vmem [resolvable:$true] %s237
          %243 = dma.hbm_to_vmem [thread:$0]  %s236, 2048, %s238, %s224, 64, 64, 4
        $region28: #{tpu_custom_call.1} parent=23 // pred_fallthru
          _
        // Predicated region
        $region29: #{tpu_custom_call.1} parent=23 // pred_check
          %p244 = pneg %p83
        $region30: #{tpu_custom_call.1} parent=23 // pred_check_branch
          %246 = sbr.rel (%p244) target = $region32
        $region31: #{tpu_custom_call.1} parent=23 // pred_region
          %s247 = sand.u32 %s21, 1
          %s248 = scalar_lea.sflag [#allocation7], %s247
          %s249 = sand.u32 %s73, 1
          %s250 = smul.addr %s249, 8
          %s251 = scalar_lea.vmem [#allocation6], %s250
          %s253 = ssub.s32 128, 128
          %254 = vsyncadd %s248, %s253
          %s255 = sadd.s32 %s29, %s28
          %s256 = smul.addr %s255, 128
          %s257 = scalar_lea.hbm %s1, %s256
          %s259 = sshll.u32 %s251, 4
          %s260 = int_to_ptr.vmem [resolvable:$true] %s259
          %262 = dma.hbm_to_vmem [thread:$0]  %s257, 128, %s260, %s248
        $region32: #{tpu_custom_call.1} parent=23 // pred_fallthru
          _
        // Predicated region
        $region33: #{tpu_custom_call.1} parent=23 // pred_check
          %p263 = pneg %p111
        $region34: #{tpu_custom_call.1} parent=23 // pred_check_branch
          %265 = sbr.rel (%p263) target = $region36
        $region35: #{tpu_custom_call.1} parent=23 // pred_region
          %s266 = sand.u32 %s21, 1
          %s267 = scalar_lea.sflag [#allocation7], %s266
          %s268 = sand.u32 %s101, 1
          %s269 = smul.addr %s268, 8
          %s270 = scalar_lea.vmem [#allocation8], %s269
          %s272 = ssub.s32 128, 128
          %273 = vsyncadd %s267, %s272
          %s274 = sadd.s32 %s29, %s28
          %s275 = smul.addr %s274, 128
          %s276 = scalar_lea.hbm %s2, %s275
          %s278 = sshll.u32 %s270, 4
          %s279 = int_to_ptr.vmem [resolvable:$true] %s278
          %281 = dma.hbm_to_vmem [thread:$0]  %s276, 128, %s279, %s267
        $region36: #{tpu_custom_call.1} parent=23 // pred_fallthru
          _
      $region24: #{tpu_custom_call.1} parent=5 // pred_fallthru
        _
      %p282 = scmp.le.s32.totalorder 1, %s21
      %p283 = scmp.lt.s32.totalorder %s21, 3
      %p284 = pnand %p282, %p283
      %p285 = pneg %p284
      // Predicated region
      $region37: #{tpu_custom_call.1} parent=5 // pred_check
        _
      $region38: #{tpu_custom_call.1} parent=5 // pred_check_branch
        %287 = sbr.rel (%p284) target = $region40
      $region39: #{tpu_custom_call.1} parent=5 // pred_region
        %s288 = ssub.s32 %s21, 1
        %s289 = sand.u32 %s48, 1
        %s290 = scalar_lea.sflag [#allocation4], %s289
        %s291 = sand.u32 %s48, 1
        %s292 = smul.addr %s291, 128
        %s293 = scalar_lea.vmem [#allocation3], %s292
        // Predicated region
        $region41: #{tpu_custom_call.1} parent=39 // pred_check
          %p294 = pneg %p61
        $region42: #{tpu_custom_call.1} parent=39 // pred_check_branch
          %296 = sbr.rel (%p294) target = $region44
        $region43: #{tpu_custom_call.1} parent=39 // pred_region
          %297 = dma.done %s290, 2048
        $region44: #{tpu_custom_call.1} parent=39 // pred_fallthru
          _
        %s298 = sand.u32 %s26, 1
        %s299 = scalar_lea.sflag [#allocation7], %s298
        %s300 = sand.u32 %s76, 1
        %s301 = smul.addr %s300, 8
        %s302 = scalar_lea.vmem [#allocation6], %s301
        // Predicated region
        $region45: #{tpu_custom_call.1} parent=39 // pred_check
          %p303 = pneg %p89
        $region46: #{tpu_custom_call.1} parent=39 // pred_check_branch
          %305 = sbr.rel (%p303) target = $region48
        $region47: #{tpu_custom_call.1} parent=39 // pred_region
          %306 = dma.done %s299, 128
        $region48: #{tpu_custom_call.1} parent=39 // pred_fallthru
          _
        %s307 = sand.u32 %s26, 1
        %s308 = scalar_lea.sflag [#allocation7], %s307
        %s309 = sand.u32 %s104, 1
        %s310 = smul.addr %s309, 8
        %s311 = scalar_lea.vmem [#allocation8], %s310
        // Predicated region
        $region49: #{tpu_custom_call.1} parent=39 // pred_check
          %p312 = pneg %p117
        $region50: #{tpu_custom_call.1} parent=39 // pred_check_branch
          %314 = sbr.rel (%p312) target = $region52
        $region51: #{tpu_custom_call.1} parent=39 // pred_region
          %315 = dma.done %s308, 128
        $region52: #{tpu_custom_call.1} parent=39 // pred_fallthru
          _
        // Predicated region
        $region53: #{tpu_custom_call.1} parent=39 // pred_check
          %p316 = pneg %p138
        $region54: #{tpu_custom_call.1} parent=39 // pred_check_branch
          %318 = sbr.rel (%p316) target = $region56
        $region55: #{tpu_custom_call.1} parent=39 // pred_region
          %319 = dma.done [#allocation10], 4608
        $region56: #{tpu_custom_call.1} parent=39 // pred_fallthru
          _
        %s320 = sand.u32 %s48, 1
        %s321 = scalar_lea.sflag [#allocation4], %s320
        %s322 = sand.u32 %s48, 1
        %s323 = smul.addr %s322, 128
        %s324 = scalar_lea.vmem [#allocation3], %s323
        %p325 = pneg %p61
        %p326 = pneg %p58
        %s327 = sand.u32 %s26, 1
        %s328 = scalar_lea.sflag [#allocation7], %s327
        %s329 = sand.u32 %s76, 1
        %s330 = smul.addr %s329, 8
        %s331 = scalar_lea.vmem [#allocation6], %s330
        %p332 = pneg %p89
        %p333 = pneg %p86
        %s334 = sand.u32 %s26, 1
        %s335 = scalar_lea.sflag [#allocation7], %s334
        %s336 = sand.u32 %s104, 1
        %s337 = smul.addr %s336, 8
        %s338 = scalar_lea.vmem [#allocation8], %s337
        %p339 = pneg %p117
        %p340 = pneg %p114
        %p341 = pneg %p138
        %p342 = pneg %p135
        %p343 = pneg %p159
        %p344 = pneg %p156
        %p345 = pneg %p185
        %p346 = pneg %p182
        %s347 = sand.u32 %s172, 1
        %s348 = scalar_lea.sflag [#allocation5], %s347
        %s349 = sand.u32 %s172, 1
        %s350 = smul.addr %s349, 8
        %s351 = scalar_lea.vmem [#allocation11], %s350
        %s352 = smul.u32 8, %s30
        %s353 = smul.u32 4, %s31
        %p356 = scmp.eq.s32.totalorder %s31, 0
        // Predicated region
        $region57: #{tpu_custom_call.1} parent=39 // pred_check
          %p357 = pneg %p356
        $region58: #{tpu_custom_call.1} parent=39 // pred_check_branch
          %359 = sbr.rel (%p357) target = $region60
        $region59: #{tpu_custom_call.1} parent=39 // pred_region
          %360 = vst [vmem:[#allocation2] sm:$0xf] 0.0
          %361 = vst [vmem:[#allocation2 + $0x4] sm:$0xf] 0.0
          %362 = vst [vmem:[#allocation2 + $0x8] sm:$0xf] 0.0
          %363 = vst [vmem:[#allocation2 + $0xc] sm:$0xf] 0.0
          %364 = vst [vmem:[#allocation2 + $0x10] sm:$0xf] 0.0
          %365 = vst [vmem:[#allocation2 + $0x14] sm:$0xf] 0.0
          %366 = vst [vmem:[#allocation2 + $0x18] sm:$0xf] 0.0
          %367 = vst [vmem:[#allocation2 + $0x1c] sm:$0xf] 0.0
        $region60: #{tpu_custom_call.1} parent=39 // pred_fallthru
          _
        %v368 = vld [vmem:[%s302] sm:$0xff]
        %v369 = vld [vmem:[%s311] sm:$0xff]
        %vm370 = vcmp.eq.s32.totalorder %v368, 1
        %v371 = vsel %vm370, 1, 0
        %v372 = vcvt.s32.f32 %v371
        %v373 = vpack.c.bf16 %v372, %v372
        %v376 = vunpack.c.l.s4 1966171168
        %v377 = vunpack.c.0.s8 %v376
        %v378 = vlaneseq
        %v379 = vshrl.u32 %v378, 7
        %v380 = vsub.s32 %v377, %v379
        %v381 = vrot.slane %v373, %v380
        %v382 = vcombine.high %v381, %v381
        %v384 = vunpack.c.l.s4 1966171168
        %v385 = vunpack.c.0.s8 %v384
        %v386 = vlaneseq
        %v387 = vshrl.u32 %v386, 7
        %v388 = vsub.s32 %v385, %v387
        %v389 = vrot.slane %v381, %v388
        %v391 = vunpack.c.l.s4 1966171168
        %v392 = vunpack.c.0.s8 %v391
        %v393 = vlaneseq
        %v394 = vshrl.u32 %v393, 7
        %v395 = vsub.s32 %v392, %v394
        %v396 = vrot.slane %v382, %v395
        %v397 = vcombine.high %v389, %v389
        %v398 = vcombine.high %v396, %v396
        %v399 = vunpack.i.l.s16 %v389
        %v400 = vunpack.i.h.s16 %v389
        %v401 = vunpack.i.l.s16 %v396
        %v402 = vunpack.i.h.s16 %v396
        %v403 = vunpack.i.l.s16 %v397
        %v404 = vunpack.i.h.s16 %v397
        %v405 = vunpack.i.l.s16 %v398
        %v406 = vunpack.i.h.s16 %v398
        %vm407 = vcmp.eq.s32.totalorder %v369, 1
        %v408 = vsel %vm407, 1, 0
        %v409 = vcvt.s32.f32 %v408
        %v410 = vpack.c.bf16 %v409, %v409
        %v413 = vunpack.c.l.s4 1966171168
        %v414 = vunpack.c.0.s8 %v413
        %v415 = vlaneseq
        %v416 = vshrl.u32 %v415, 7
        %v417 = vsub.s32 %v414, %v416
        %v418 = vrot.slane %v410, %v417
        %v419 = vcombine.high %v418, %v418
        %v421 = vunpack.c.l.s4 1966171168
        %v422 = vunpack.c.0.s8 %v421
        %v423 = vlaneseq
        %v424 = vshrl.u32 %v423, 7
        %v425 = vsub.s32 %v422, %v424
        %v426 = vrot.slane %v418, %v425
        %v428 = vunpack.c.l.s4 1966171168
        %v429 = vunpack.c.0.s8 %v428
        %v430 = vlaneseq
        %v431 = vshrl.u32 %v430, 7
        %v432 = vsub.s32 %v429, %v431
        %v433 = vrot.slane %v419, %v432
        %v434 = vcombine.high %v426, %v426
        %v435 = vcombine.high %v433, %v433
        %v436 = vunpack.i.l.s16 %v426
        %v437 = vunpack.i.h.s16 %v426
        %v438 = vunpack.i.l.s16 %v433
        %v439 = vunpack.i.h.s16 %v433
        %v440 = vunpack.i.l.s16 %v434
        %v441 = vunpack.i.h.s16 %v434
        %v442 = vunpack.i.l.s16 %v435
        %v443 = vunpack.i.h.s16 %v435
        %vm444 = vcmp.eq.s32.totalorder %v369, 3
        %v445 = vsel %vm444, 1, 0
        %v446 = vcvt.s32.f32 %v445
        %v447 = vpack.c.bf16 %v446, %v446
        %v450 = vunpack.c.l.s4 1966171168
        %v451 = vunpack.c.0.s8 %v450
        %v452 = vlaneseq
        %v453 = vshrl.u32 %v452, 7
        %v454 = vsub.s32 %v451, %v453
        %v455 = vrot.slane %v447, %v454
        %v456 = vcombine.high %v455, %v455
        %v458 = vunpack.c.l.s4 1966171168
        %v459 = vunpack.c.0.s8 %v458
        %v460 = vlaneseq
        %v461 = vshrl.u32 %v460, 7
        %v462 = vsub.s32 %v459, %v461
        %v463 = vrot.slane %v455, %v462
        %v465 = vunpack.c.l.s4 1966171168
        %v466 = vunpack.c.0.s8 %v465
        %v467 = vlaneseq
        %v468 = vshrl.u32 %v467, 7
        %v469 = vsub.s32 %v466, %v468
        %v470 = vrot.slane %v456, %v469
        %v471 = vcombine.high %v463, %v463
        %v472 = vcombine.high %v470, %v470
        %v473 = vunpack.i.l.s16 %v463
        %v474 = vunpack.i.h.s16 %v463
        %v475 = vunpack.i.l.s16 %v470
        %v476 = vunpack.i.h.s16 %v470
        %v477 = vunpack.i.l.s16 %v471
        %v478 = vunpack.i.h.s16 %v471
        %v479 = vunpack.i.l.s16 %v472
        %v480 = vunpack.i.h.s16 %v472
        %v481 = vpack.i.b16 %v399, %v399
        %v482 = vpack.i.b16 %v400, %v400
        %v483 = vpack.i.b16 %v401, %v401
        %v484 = vpack.i.b16 %v402, %v402
        %v485 = vpack.i.b16 %v403, %v403
        %v486 = vpack.i.b16 %v404, %v404
        %v487 = vpack.i.b16 %v405, %v405
        %v488 = vpack.i.b16 %v406, %v406
        %v489 = vlaneseq
        %v490 = vshrl.u32 %v489, 7
        %v491 = vsub.s32 0, %v490
        %v492 = vrot.slane %v481, %v491
        %v493 = vlaneseq
        %v494 = vshrl.u32 %v493, 7
        %v495 = vsub.s32 0, %v494
        %v496 = vrot.slane %v482, %v495
        %v497 = vlaneseq
        %v498 = vshrl.u32 %v497, 7
        %v499 = vsub.s32 0, %v498
        %v500 = vrot.slane %v483, %v499
        %v501 = vlaneseq
        %v502 = vshrl.u32 %v501, 7
        %v503 = vsub.s32 0, %v502
        %v504 = vrot.slane %v484, %v503
        %v505 = vlaneseq
        %v506 = vshrl.u32 %v505, 7
        %v507 = vsub.s32 0, %v506
        %v508 = vrot.slane %v485, %v507
        %v509 = vlaneseq
        %v510 = vshrl.u32 %v509, 7
        %v511 = vsub.s32 0, %v510
        %v512 = vrot.slane %v486, %v511
        %v513 = vlaneseq
        %v514 = vshrl.u32 %v513, 7
        %v515 = vsub.s32 0, %v514
        %v516 = vrot.slane %v487, %v515
        %v517 = vlaneseq
        %v518 = vshrl.u32 %v517, 7
        %v519 = vsub.s32 0, %v518
        %v520 = vrot.slane %v488, %v519
        %v529 = vpack.i.b16 %v436, %v436
        %v530 = vpack.i.b16 %v437, %v437
        %v531 = vpack.i.b16 %v438, %v438
        %v532 = vpack.i.b16 %v439, %v439
        %v533 = vpack.i.b16 %v440, %v440
        %v534 = vpack.i.b16 %v441, %v441
        %v535 = vpack.i.b16 %v442, %v442
        %v536 = vpack.i.b16 %v443, %v443
        %v537 = vlaneseq
        %v538 = vshrl.u32 %v537, 7
        %v539 = vsub.s32 0, %v538
        %v540 = vrot.slane %v529, %v539
        %v541 = vlaneseq
        %v542 = vshrl.u32 %v541, 7
        %v543 = vsub.s32 0, %v542
        %v544 = vrot.slane %v530, %v543
        %v545 = vlaneseq
        %v546 = vshrl.u32 %v545, 7
        %v547 = vsub.s32 0, %v546
        %v548 = vrot.slane %v531, %v547
        %v549 = vlaneseq
        %v550 = vshrl.u32 %v549, 7
        %v551 = vsub.s32 0, %v550
        %v552 = vrot.slane %v532, %v551
        %v553 = vlaneseq
        %v554 = vshrl.u32 %v553, 7
        %v555 = vsub.s32 0, %v554
        %v556 = vrot.slane %v533, %v555
        %v557 = vlaneseq
        %v558 = vshrl.u32 %v557, 7
        %v559 = vsub.s32 0, %v558
        %v560 = vrot.slane %v534, %v559
        %v561 = vlaneseq
        %v562 = vshrl.u32 %v561, 7
        %v563 = vsub.s32 0, %v562
        %v564 = vrot.slane %v535, %v563
        %v565 = vlaneseq
        %v566 = vshrl.u32 %v565, 7
        %v567 = vsub.s32 0, %v566
        %v568 = vrot.slane %v536, %v567
        %v569 = vpack.i.b16 %v473, %v473
        %v570 = vpack.i.b16 %v474, %v474
        %v571 = vpack.i.b16 %v475, %v475
        %v572 = vpack.i.b16 %v476, %v476
        %v573 = vpack.i.b16 %v477, %v477
        %v574 = vpack.i.b16 %v478, %v478
        %v575 = vpack.i.b16 %v479, %v479
        %v576 = vpack.i.b16 %v480, %v480
        %v577 = vlaneseq
        %v578 = vshrl.u32 %v577, 7
        %v579 = vsub.s32 0, %v578
        %v580 = vrot.slane %v569, %v579
        %v581 = vlaneseq
        %v582 = vshrl.u32 %v581, 7
        %v583 = vsub.s32 0, %v582
        %v584 = vrot.slane %v570, %v583
        %v585 = vlaneseq
        %v586 = vshrl.u32 %v585, 7
        %v587 = vsub.s32 0, %v586
        %v588 = vrot.slane %v571, %v587
        %v589 = vlaneseq
        %v590 = vshrl.u32 %v589, 7
        %v591 = vsub.s32 0, %v590
        %v592 = vrot.slane %v572, %v591
        %v593 = vlaneseq
        %v594 = vshrl.u32 %v593, 7
        %v595 = vsub.s32 0, %v594
        %v596 = vrot.slane %v573, %v595
        %v597 = vlaneseq
        %v598 = vshrl.u32 %v597, 7
        %v599 = vsub.s32 0, %v598
        %v600 = vrot.slane %v574, %v599
        %v601 = vlaneseq
        %v602 = vshrl.u32 %v601, 7
        %v603 = vsub.s32 0, %v602
        %v604 = vrot.slane %v575, %v603
        %v605 = vlaneseq
        %v606 = vshrl.u32 %v605, 7
        %v607 = vsub.s32 0, %v606
        %v608 = vrot.slane %v576, %v607
        %vm617 = vcmask 1040384
        %vm618 = vsmask.f32 256
        %vm619 = vmand %vm617, %vm618
        %v620 = vsel %vm619, 1065369472, %v492
        %v621 = vsel %vm619, 1065369472, %v496
        %v622 = vsel %vm619, 1065369472, %v500
        %v623 = vsel %vm619, 1065369472, %v504
        %v624 = vsel %vm619, 1065369472, %v508
        %v625 = vsel %vm619, 1065369472, %v512
        %v626 = vsel %vm619, 1065369472, %v516
        %v627 = vsel %vm619, 1065369472, %v520
        %vm628 = vcmask 1040384
        %v631 = vsel %vm628, %v620, %v540
        %v635 = vsel %vm628, %v621, %v544
        %v639 = vsel %vm628, %v622, %v548
        %v643 = vsel %vm628, %v623, %v552
        %v647 = vsel %vm628, %v624, %v556
        %v651 = vsel %vm628, %v625, %v560
        %v655 = vsel %vm628, %v626, %v564
        %v659 = vsel %vm628, %v627, %v568
        %vm661 = vcmask 1041408
        %vm662 = vsmask.f32 1280
        %vm663 = vmand %vm661, %vm662
        %v664 = vsel %vm663, %v631, %v580
        %v665 = vsel %vm663, %v635, %v584
        %v666 = vsel %vm663, %v639, %v588
        %v667 = vsel %vm663, %v643, %v592
        %v668 = vsel %vm663, %v647, %v596
        %v669 = vsel %vm663, %v651, %v600
        %v670 = vsel %vm663, %v655, %v604
        %v671 = vsel %vm663, %v659, %v608
        %v672 = vld [vmem:[#allocation2] sm:$0xf]
        %v673 = vld [vmem:[#allocation2 + $0x4] sm:$0xf]
        %v674 = vld [vmem:[#allocation2 + $0x8] sm:$0xf]
        %v675 = vld [vmem:[#allocation2 + $0xc] sm:$0xf]
        %v676 = vld [vmem:[#allocation2 + $0x10] sm:$0xf]
        %v677 = vld [vmem:[#allocation2 + $0x14] sm:$0xf]
        %v678 = vld [vmem:[#allocation2 + $0x18] sm:$0xf]
        %v679 = vld [vmem:[#allocation2 + $0x1c] sm:$0xf]
        %v680 = vld [vmem:[%s293] sm:$0xf]
        %v681 = vld [vmem:[%s293 + $0x4] sm:$0xf]
        %v682 = vld [vmem:[%s293 + $0x8] sm:$0xf]
        %v683 = vld [vmem:[%s293 + $0xc] sm:$0xf]
        %v684 = vld [vmem:[%s293 + $0x10] sm:$0xf]
        %v685 = vld [vmem:[%s293 + $0x14] sm:$0xf]
        %v686 = vld [vmem:[%s293 + $0x18] sm:$0xf]
        %v687 = vld [vmem:[%s293 + $0x1c] sm:$0xf]
        %v688 = vld [vmem:[%s293 + $0x20] sm:$0xf]
        %v689 = vld [vmem:[%s293 + $0x24] sm:$0xf]
        %v690 = vld [vmem:[%s293 + $0x28] sm:$0xf]
        %v691 = vld [vmem:[%s293 + $0x2c] sm:$0xf]
        %v692 = vld [vmem:[%s293 + $0x30] sm:$0xf]
        %v693 = vld [vmem:[%s293 + $0x34] sm:$0xf]
        %v694 = vld [vmem:[%s293 + $0x38] sm:$0xf]
        %v695 = vld [vmem:[%s293 + $0x3c] sm:$0xf]
        %v696 = vld [vmem:[%s293 + $0x40] sm:$0xf]
        %v697 = vld [vmem:[%s293 + $0x44] sm:$0xf]
        %v698 = vld [vmem:[%s293 + $0x48] sm:$0xf]
        %v699 = vld [vmem:[%s293 + $0x4c] sm:$0xf]
        %v700 = vld [vmem:[%s293 + $0x50] sm:$0xf]
        %v701 = vld [vmem:[%s293 + $0x54] sm:$0xf]
        %v702 = vld [vmem:[%s293 + $0x58] sm:$0xf]
        %v703 = vld [vmem:[%s293 + $0x5c] sm:$0xf]
        %v704 = vld [vmem:[%s293 + $0x60] sm:$0xf]
        %v705 = vld [vmem:[%s293 + $0x64] sm:$0xf]
        %v706 = vld [vmem:[%s293 + $0x68] sm:$0xf]
        %v707 = vld [vmem:[%s293 + $0x6c] sm:$0xf]
        %v708 = vld [vmem:[%s293 + $0x70] sm:$0xf]
        %v709 = vld [vmem:[%s293 + $0x74] sm:$0xf]
        %v710 = vld [vmem:[%s293 + $0x78] sm:$0xf]
        %v711 = vld [vmem:[%s293 + $0x7c] sm:$0xf]
        %v716 = vunpack.c.l.b16 %v680
        %v717 = vunpack.c.l.b16 %v681
        %v718 = vunpack.c.l.b16 %v682
        %v719 = vunpack.c.l.b16 %v683
        %v720 = vpack.c.b16 %v717, %v716
        %v721 = vpack.c.b16 %v719, %v718
        %vm724 = vcmask 261120
        %v726 = vsel %vm724, %v664, 0
        %728 = vmatprep.subr.bf16.mxu0 0
        %729 = vmatpush1.bf16.msra.mxu0 0
        %730 = vmatprep.subr.bf16.mxu0 0
        %731 = vmatpush1.bf16.msra.mxu0 0
        %732 = vmatprep.subr.bf16.mxu0 0
        %733 = vmatpush1.bf16.msra.mxu0 0
        %734 = vmatprep.subr.bf16.mxu0 0
        %735 = vmatpush1.bf16.msra.mxu0 0
        %736 = vmatprep.subr.bf16.mxu0 0
        %737 = vmatpush1.bf16.msra.mxu0 0
        %738 = vmatprep.subr.bf16.mxu0 0
        %739 = vmatpush1.bf16.msra.mxu0 0
        %740 = vmatprep.subr.bf16.mxu0 0
        %741 = vmatpush1.bf16.msra.mxu0 %v721
        %742 = vmatprep.subr.bf16.mxu0 0
        %743 = vmatpush1.bf16.msra.mxu0 %v720
        %744 = vmatprep.subr.bf16.mxu0 0
        %745 = vmatpush2.bf16.msra.mxu0 0
        %746 = vmatprep.subr.bf16.mxu0 0
        %747 = vmatpush2.bf16.msra.mxu0 0
        %748 = vmatprep.subr.bf16.mxu0 0
        %749 = vmatpush2.bf16.msra.mxu0 0
        %750 = vmatprep.subr.bf16.mxu0 0
        %751 = vmatpush2.bf16.msra.mxu0 0
        %752 = vmatprep.subr.bf16.mxu0 0
        %753 = vmatpush2.bf16.msra.mxu0 0
        %754 = vmatprep.subr.bf16.mxu0 0
        %755 = vmatpush2.bf16.msra.mxu0 0
        %756 = vmatprep.subr.bf16.mxu0 0
        %757 = vmatpush2.bf16.msra.mxu0 0
        %758 = vmatprep.subr.bf16.mxu0 0
        %759 = vmatpush2.bf16.msra.mxu0 0
        %760 = vmatprep.mubr.bf16.mxu0 0
        %761 = vmatmul.mubr.bf16.gmra.mxu0 %v726
        %v762 = vpop.f32.mrf.mxu0
        %v763 = vadd.f32 0.0, %v762
        %v764 = vpop.f32.mrf.mxu0
        %v765 = vpop.f32.mrf.mxu0
        %v766 = vpop.f32.mrf.mxu0
        %767 = vdwg.mxu0
        %v772 = vunpack.c.l.b16 %v684
        %v773 = vunpack.c.l.b16 %v685
        %v774 = vunpack.c.l.b16 %v686
        %v775 = vunpack.c.l.b16 %v687
        %v776 = vpack.c.b16 %v773, %v772
        %v777 = vpack.c.b16 %v775, %v774
        %v781 = vsel %vm724, %v665, 0
        %783 = vmatprep.subr.bf16.mxu0 0
        %784 = vmatpush1.bf16.msra.mxu0 0
        %785 = vmatprep.subr.bf16.mxu0 0
        %786 = vmatpush1.bf16.msra.mxu0 0
        %787 = vmatprep.subr.bf16.mxu0 0
        %788 = vmatpush1.bf16.msra.mxu0 0
        %789 = vmatprep.subr.bf16.mxu0 0
        %790 = vmatpush1.bf16.msra.mxu0 0
        %791 = vmatprep.subr.bf16.mxu0 0
        %792 = vmatpush1.bf16.msra.mxu0 0
        %793 = vmatprep.subr.bf16.mxu0 0
        %794 = vmatpush1.bf16.msra.mxu0 0
        %795 = vmatprep.subr.bf16.mxu0 0
        %796 = vmatpush1.bf16.msra.mxu0 %v777
        %797 = vmatprep.subr.bf16.mxu0 0
        %798 = vmatpush1.bf16.msra.mxu0 %v776
        %799 = vmatprep.subr.bf16.mxu0 0
        %800 = vmatpush2.bf16.msra.mxu0 0
        %801 = vmatprep.subr.bf16.mxu0 0
        %802 = vmatpush2.bf16.msra.mxu0 0
        %803 = vmatprep.subr.bf16.mxu0 0
        %804 = vmatpush2.bf16.msra.mxu0 0
        %805 = vmatprep.subr.bf16.mxu0 0
        %806 = vmatpush2.bf16.msra.mxu0 0
        %807 = vmatprep.subr.bf16.mxu0 0
        %808 = vmatpush2.bf16.msra.mxu0 0
        %809 = vmatprep.subr.bf16.mxu0 0
        %810 = vmatpush2.bf16.msra.mxu0 0
        %811 = vmatprep.subr.bf16.mxu0 0
        %812 = vmatpush2.bf16.msra.mxu0 0
        %813 = vmatprep.subr.bf16.mxu0 0
        %814 = vmatpush2.bf16.msra.mxu0 0
        %815 = vmatprep.mubr.bf16.mxu0 0
        %816 = vmatmul.mubr.bf16.gmra.mxu0 %v781
        %v817 = vpop.f32.mrf.mxu0
        %v818 = vadd.f32 0.0, %v817
        %v819 = vpop.f32.mrf.mxu0
        %v820 = vpop.f32.mrf.mxu0
        %v821 = vpop.f32.mrf.mxu0
        %822 = vdwg.mxu0
        %v827 = vunpack.c.l.b16 %v688
        %v828 = vunpack.c.l.b16 %v689
        %v829 = vunpack.c.l.b16 %v690
        %v830 = vunpack.c.l.b16 %v691
        %v831 = vpack.c.b16 %v828, %v827
        %v832 = vpack.c.b16 %v830, %v829
        %v836 = vsel %vm724, %v666, 0
        %838 = vmatprep.subr.bf16.mxu0 0
        %839 = vmatpush1.bf16.msra.mxu0 0
        %840 = vmatprep.subr.bf16.mxu0 0
        %841 = vmatpush1.bf16.msra.mxu0 0
        %842 = vmatprep.subr.bf16.mxu0 0
        %843 = vmatpush1.bf16.msra.mxu0 0
        %844 = vmatprep.subr.bf16.mxu0 0
        %845 = vmatpush1.bf16.msra.mxu0 0
        %846 = vmatprep.subr.bf16.mxu0 0
        %847 = vmatpush1.bf16.msra.mxu0 0
        %848 = vmatprep.subr.bf16.mxu0 0
        %849 = vmatpush1.bf16.msra.mxu0 0
        %850 = vmatprep.subr.bf16.mxu0 0
        %851 = vmatpush1.bf16.msra.mxu0 %v832
        %852 = vmatprep.subr.bf16.mxu0 0
        %853 = vmatpush1.bf16.msra.mxu0 %v831
        %854 = vmatprep.subr.bf16.mxu0 0
        %855 = vmatpush2.bf16.msra.mxu0 0
        %856 = vmatprep.subr.bf16.mxu0 0
        %857 = vmatpush2.bf16.msra.mxu0 0
        %858 = vmatprep.subr.bf16.mxu0 0
        %859 = vmatpush2.bf16.msra.mxu0 0
        %860 = vmatprep.subr.bf16.mxu0 0
        %861 = vmatpush2.bf16.msra.mxu0 0
        %862 = vmatprep.subr.bf16.mxu0 0
        %863 = vmatpush2.bf16.msra.mxu0 0
        %864 = vmatprep.subr.bf16.mxu0 0
        %865 = vmatpush2.bf16.msra.mxu0 0
        %866 = vmatprep.subr.bf16.mxu0 0
        %867 = vmatpush2.bf16.msra.mxu0 0
        %868 = vmatprep.subr.bf16.mxu0 0
        %869 = vmatpush2.bf16.msra.mxu0 0
        %870 = vmatprep.mubr.bf16.mxu0 0
        %871 = vmatmul.mubr.bf16.gmra.mxu0 %v836
        %v872 = vpop.f32.mrf.mxu0
        %v873 = vadd.f32 0.0, %v872
        %v874 = vpop.f32.mrf.mxu0
        %v875 = vpop.f32.mrf.mxu0
        %v876 = vpop.f32.mrf.mxu0
        %877 = vdwg.mxu0
        %v882 = vunpack.c.l.b16 %v692
        %v883 = vunpack.c.l.b16 %v693
        %v884 = vunpack.c.l.b16 %v694
        %v885 = vunpack.c.l.b16 %v695
        %v886 = vpack.c.b16 %v883, %v882
        %v887 = vpack.c.b16 %v885, %v884
        %v891 = vsel %vm724, %v667, 0
        %893 = vmatprep.subr.bf16.mxu0 0
        %894 = vmatpush1.bf16.msra.mxu0 0
        %895 = vmatprep.subr.bf16.mxu0 0
        %896 = vmatpush1.bf16.msra.mxu0 0
        %897 = vmatprep.subr.bf16.mxu0 0
        %898 = vmatpush1.bf16.msra.mxu0 0
        %899 = vmatprep.subr.bf16.mxu0 0
        %900 = vmatpush1.bf16.msra.mxu0 0
        %901 = vmatprep.subr.bf16.mxu0 0
        %902 = vmatpush1.bf16.msra.mxu0 0
        %903 = vmatprep.subr.bf16.mxu0 0
        %904 = vmatpush1.bf16.msra.mxu0 0
        %905 = vmatprep.subr.bf16.mxu0 0
        %906 = vmatpush1.bf16.msra.mxu0 %v887
        %907 = vmatprep.subr.bf16.mxu0 0
        %908 = vmatpush1.bf16.msra.mxu0 %v886
        %909 = vmatprep.subr.bf16.mxu0 0
        %910 = vmatpush2.bf16.msra.mxu0 0
        %911 = vmatprep.subr.bf16.mxu0 0
        %912 = vmatpush2.bf16.msra.mxu0 0
        %913 = vmatprep.subr.bf16.mxu0 0
        %914 = vmatpush2.bf16.msra.mxu0 0
        %915 = vmatprep.subr.bf16.mxu0 0
        %916 = vmatpush2.bf16.msra.mxu0 0
        %917 = vmatprep.subr.bf16.mxu0 0
        %918 = vmatpush2.bf16.msra.mxu0 0
        %919 = vmatprep.subr.bf16.mxu0 0
        %920 = vmatpush2.bf16.msra.mxu0 0
        %921 = vmatprep.subr.bf16.mxu0 0
        %922 = vmatpush2.bf16.msra.mxu0 0
        %923 = vmatprep.subr.bf16.mxu0 0
        %924 = vmatpush2.bf16.msra.mxu0 0
        %925 = vmatprep.mubr.bf16.mxu0 0
        %926 = vmatmul.mubr.bf16.gmra.mxu0 %v891
        %v927 = vpop.f32.mrf.mxu0
        %v928 = vadd.f32 0.0, %v927
        %v929 = vpop.f32.mrf.mxu0
        %v930 = vpop.f32.mrf.mxu0
        %v931 = vpop.f32.mrf.mxu0
        %932 = vdwg.mxu0
        %v937 = vunpack.c.l.b16 %v696
        %v938 = vunpack.c.l.b16 %v697
        %v939 = vunpack.c.l.b16 %v698
        %v940 = vunpack.c.l.b16 %v699
        %v941 = vpack.c.b16 %v938, %v937
        %v942 = vpack.c.b16 %v940, %v939
        %v946 = vsel %vm724, %v668, 0
        %948 = vmatprep.subr.bf16.mxu0 0
        %949 = vmatpush1.bf16.msra.mxu0 0
        %950 = vmatprep.subr.bf16.mxu0 0
        %951 = vmatpush1.bf16.msra.mxu0 0
        %952 = vmatprep.subr.bf16.mxu0 0
        %953 = vmatpush1.bf16.msra.mxu0 0
        %954 = vmatprep.subr.bf16.mxu0 0
        %955 = vmatpush1.bf16.msra.mxu0 0
        %956 = vmatprep.subr.bf16.mxu0 0
        %957 = vmatpush1.bf16.msra.mxu0 0
        %958 = vmatprep.subr.bf16.mxu0 0
        %959 = vmatpush1.bf16.msra.mxu0 0
        %960 = vmatprep.subr.bf16.mxu0 0
        %961 = vmatpush1.bf16.msra.mxu0 %v942
        %962 = vmatprep.subr.bf16.mxu0 0
        %963 = vmatpush1.bf16.msra.mxu0 %v941
        %964 = vmatprep.subr.bf16.mxu0 0
        %965 = vmatpush2.bf16.msra.mxu0 0
        %966 = vmatprep.subr.bf16.mxu0 0
        %967 = vmatpush2.bf16.msra.mxu0 0
        %968 = vmatprep.subr.bf16.mxu0 0
        %969 = vmatpush2.bf16.msra.mxu0 0
        %970 = vmatprep.subr.bf16.mxu0 0
        %971 = vmatpush2.bf16.msra.mxu0 0
        %972 = vmatprep.subr.bf16.mxu0 0
        %973 = vmatpush2.bf16.msra.mxu0 0
        %974 = vmatprep.subr.bf16.mxu0 0
        %975 = vmatpush2.bf16.msra.mxu0 0
        %976 = vmatprep.subr.bf16.mxu0 0
        %977 = vmatpush2.bf16.msra.mxu0 0
        %978 = vmatprep.subr.bf16.mxu0 0
        %979 = vmatpush2.bf16.msra.mxu0 0
        %980 = vmatprep.mubr.bf16.mxu0 0
        %981 = vmatmul.mubr.bf16.gmra.mxu0 %v946
        %v982 = vpop.f32.mrf.mxu0
        %v983 = vadd.f32 0.0, %v982
        %v984 = vpop.f32.mrf.mxu0
        %v985 = vpop.f32.mrf.mxu0
        %v986 = vpop.f32.mrf.mxu0
        %987 = vdwg.mxu0
        %v992 = vunpack.c.l.b16 %v700
        %v993 = vunpack.c.l.b16 %v701
        %v994 = vunpack.c.l.b16 %v702
        %v995 = vunpack.c.l.b16 %v703
        %v996 = vpack.c.b16 %v993, %v992
        %v997 = vpack.c.b16 %v995, %v994
        %v1001 = vsel %vm724, %v669, 0
        %1003 = vmatprep.subr.bf16.mxu0 0
        %1004 = vmatpush1.bf16.msra.mxu0 0
        %1005 = vmatprep.subr.bf16.mxu0 0
        %1006 = vmatpush1.bf16.msra.mxu0 0
        %1007 = vmatprep.subr.bf16.mxu0 0
        %1008 = vmatpush1.bf16.msra.mxu0 0
        %1009 = vmatprep.subr.bf16.mxu0 0
        %1010 = vmatpush1.bf16.msra.mxu0 0
        %1011 = vmatprep.subr.bf16.mxu0 0
        %1012 = vmatpush1.bf16.msra.mxu0 0
        %1013 = vmatprep.subr.bf16.mxu0 0
        %1014 = vmatpush1.bf16.msra.mxu0 0
        %1015 = vmatprep.subr.bf16.mxu0 0
        %1016 = vmatpush1.bf16.msra.mxu0 %v997
        %1017 = vmatprep.subr.bf16.mxu0 0
        %1018 = vmatpush1.bf16.msra.mxu0 %v996
        %1019 = vmatprep.subr.bf16.mxu0 0
        %1020 = vmatpush2.bf16.msra.mxu0 0
        %1021 = vmatprep.subr.bf16.mxu0 0
        %1022 = vmatpush2.bf16.msra.mxu0 0
        %1023 = vmatprep.subr.bf16.mxu0 0
        %1024 = vmatpush2.bf16.msra.mxu0 0
        %1025 = vmatprep.subr.bf16.mxu0 0
        %1026 = vmatpush2.bf16.msra.mxu0 0
        %1027 = vmatprep.subr.bf16.mxu0 0
        %1028 = vmatpush2.bf16.msra.mxu0 0
        %1029 = vmatprep.subr.bf16.mxu0 0
        %1030 = vmatpush2.bf16.msra.mxu0 0
        %1031 = vmatprep.subr.bf16.mxu0 0
        %1032 = vmatpush2.bf16.msra.mxu0 0
        %1033 = vmatprep.subr.bf16.mxu0 0
        %1034 = vmatpush2.bf16.msra.mxu0 0
        %1035 = vmatprep.mubr.bf16.mxu0 0
        %1036 = vmatmul.mubr.bf16.gmra.mxu0 %v1001
        %v1037 = vpop.f32.mrf.mxu0
        %v1038 = vadd.f32 0.0, %v1037
        %v1039 = vpop.f32.mrf.mxu0
        %v1040 = vpop.f32.mrf.mxu0
        %v1041 = vpop.f32.mrf.mxu0
        %1042 = vdwg.mxu0
        %v1047 = vunpack.c.l.b16 %v704
        %v1048 = vunpack.c.l.b16 %v705
        %v1049 = vunpack.c.l.b16 %v706
        %v1050 = vunpack.c.l.b16 %v707
        %v1051 = vpack.c.b16 %v1048, %v1047
        %v1052 = vpack.c.b16 %v1050, %v1049
        %v1056 = vsel %vm724, %v670, 0
        %1058 = vmatprep.subr.bf16.mxu0 0
        %1059 = vmatpush1.bf16.msra.mxu0 0
        %1060 = vmatprep.subr.bf16.mxu0 0
        %1061 = vmatpush1.bf16.msra.mxu0 0
        %1062 = vmatprep.subr.bf16.mxu0 0
        %1063 = vmatpush1.bf16.msra.mxu0 0
        %1064 = vmatprep.subr.bf16.mxu0 0
        %1065 = vmatpush1.bf16.msra.mxu0 0
        %1066 = vmatprep.subr.bf16.mxu0 0
        %1067 = vmatpush1.bf16.msra.mxu0 0
        %1068 = vmatprep.subr.bf16.mxu0 0
        %1069 = vmatpush1.bf16.msra.mxu0 0
        %1070 = vmatprep.subr.bf16.mxu0 0
        %1071 = vmatpush1.bf16.msra.mxu0 %v1052
        %1072 = vmatprep.subr.bf16.mxu0 0
        %1073 = vmatpush1.bf16.msra.mxu0 %v1051
        %1074 = vmatprep.subr.bf16.mxu0 0
        %1075 = vmatpush2.bf16.msra.mxu0 0
        %1076 = vmatprep.subr.bf16.mxu0 0
        %1077 = vmatpush2.bf16.msra.mxu0 0
        %1078 = vmatprep.subr.bf16.mxu0 0
        %1079 = vmatpush2.bf16.msra.mxu0 0
        %1080 = vmatprep.subr.bf16.mxu0 0
        %1081 = vmatpush2.bf16.msra.mxu0 0
        %1082 = vmatprep.subr.bf16.mxu0 0
        %1083 = vmatpush2.bf16.msra.mxu0 0
        %1084 = vmatprep.subr.bf16.mxu0 0
        %1085 = vmatpush2.bf16.msra.mxu0 0
        %1086 = vmatprep.subr.bf16.mxu0 0
        %1087 = vmatpush2.bf16.msra.mxu0 0
        %1088 = vmatprep.subr.bf16.mxu0 0
        %1089 = vmatpush2.bf16.msra.mxu0 0
        %1090 = vmatprep.mubr.bf16.mxu0 0
        %1091 = vmatmul.mubr.bf16.gmra.mxu0 %v1056
        %v1092 = vpop.f32.mrf.mxu0
        %v1093 = vadd.f32 0.0, %v1092
        %v1094 = vpop.f32.mrf.mxu0
        %v1095 = vpop.f32.mrf.mxu0
        %v1096 = vpop.f32.mrf.mxu0
        %1097 = vdwg.mxu0
        %v1102 = vunpack.c.l.b16 %v708
        %v1103 = vunpack.c.l.b16 %v709
        %v1104 = vunpack.c.l.b16 %v710
        %v1105 = vunpack.c.l.b16 %v711
        %v1106 = vpack.c.b16 %v1103, %v1102
        %v1107 = vpack.c.b16 %v1105, %v1104
        %v1111 = vsel %vm724, %v671, 0
        %1113 = vmatprep.subr.bf16.mxu0 0
        %1114 = vmatpush1.bf16.msra.mxu0 0
        %1115 = vmatprep.subr.bf16.mxu0 0
        %1116 = vmatpush1.bf16.msra.mxu0 0
        %1117 = vmatprep.subr.bf16.mxu0 0
        %1118 = vmatpush1.bf16.msra.mxu0 0
        %1119 = vmatprep.subr.bf16.mxu0 0
        %1120 = vmatpush1.bf16.msra.mxu0 0
        %1121 = vmatprep.subr.bf16.mxu0 0
        %1122 = vmatpush1.bf16.msra.mxu0 0
        %1123 = vmatprep.subr.bf16.mxu0 0
        %1124 = vmatpush1.bf16.msra.mxu0 0
        %1125 = vmatprep.subr.bf16.mxu0 0
        %1126 = vmatpush1.bf16.msra.mxu0 %v1107
        %1127 = vmatprep.subr.bf16.mxu0 0
        %1128 = vmatpush1.bf16.msra.mxu0 %v1106
        %1129 = vmatprep.subr.bf16.mxu0 0
        %1130 = vmatpush2.bf16.msra.mxu0 0
        %1131 = vmatprep.subr.bf16.mxu0 0
        %1132 = vmatpush2.bf16.msra.mxu0 0
        %1133 = vmatprep.subr.bf16.mxu0 0
        %1134 = vmatpush2.bf16.msra.mxu0 0
        %1135 = vmatprep.subr.bf16.mxu0 0
        %1136 = vmatpush2.bf16.msra.mxu0 0
        %1137 = vmatprep.subr.bf16.mxu0 0
        %1138 = vmatpush2.bf16.msra.mxu0 0
        %1139 = vmatprep.subr.bf16.mxu0 0
        %1140 = vmatpush2.bf16.msra.mxu0 0
        %1141 = vmatprep.subr.bf16.mxu0 0
        %1142 = vmatpush2.bf16.msra.mxu0 0
        %1143 = vmatprep.subr.bf16.mxu0 0
        %1144 = vmatpush2.bf16.msra.mxu0 0
        %1145 = vmatprep.mubr.bf16.mxu0 0
        %1146 = vmatmul.mubr.bf16.gmra.mxu0 %v1111
        %v1147 = vpop.f32.mrf.mxu0
        %v1148 = vadd.f32 0.0, %v1147
        %v1149 = vpop.f32.mrf.mxu0
        %v1150 = vpop.f32.mrf.mxu0
        %v1151 = vpop.f32.mrf.mxu0
        %1152 = vdwg.mxu0
        %v1153 = vadd.f32 %v672, %v763
        %v1154 = vadd.f32 %v673, %v818
        %v1155 = vadd.f32 %v674, %v873
        %v1156 = vadd.f32 %v675, %v928
        %v1157 = vadd.f32 %v676, %v983
        %v1158 = vadd.f32 %v677, %v1038
        %v1159 = vadd.f32 %v678, %v1093
        %v1160 = vadd.f32 %v679, %v1148
        %1161 = vst [vmem:[#allocation2] sm:$0xf] %v1153
        %1162 = vst [vmem:[#allocation2 + $0x4] sm:$0xf] %v1154
        %1163 = vst [vmem:[#allocation2 + $0x8] sm:$0xf] %v1155
        %1164 = vst [vmem:[#allocation2 + $0xc] sm:$0xf] %v1156
        %1165 = vst [vmem:[#allocation2 + $0x10] sm:$0xf] %v1157
        %1166 = vst [vmem:[#allocation2 + $0x14] sm:$0xf] %v1158
        %1167 = vst [vmem:[#allocation2 + $0x18] sm:$0xf] %v1159
        %1168 = vst [vmem:[#allocation2 + $0x1c] sm:$0xf] %v1160
        // Predicated region
        $region61: #{tpu_custom_call.1} parent=39 // pred_check
          %p1169 = pneg %p356
        $region62: #{tpu_custom_call.1} parent=39 // pred_check_branch
          %1171 = sbr.rel (%p1169) target = $region64
        $region63: #{tpu_custom_call.1} parent=39 // pred_region
          %v1172 = vld [vmem:[#allocation2] sm:$0xf]
          %v1173 = vld [vmem:[#allocation2 + $0x4] sm:$0xf]
          %v1174 = vld [vmem:[#allocation2 + $0x8] sm:$0xf]
          %v1175 = vld [vmem:[#allocation2 + $0xc] sm:$0xf]
          %v1176 = vld [vmem:[#allocation2 + $0x10] sm:$0xf]
          %v1177 = vld [vmem:[#allocation2 + $0x14] sm:$0xf]
          %v1178 = vld [vmem:[#allocation2 + $0x18] sm:$0xf]
          %v1179 = vld [vmem:[#allocation2 + $0x1c] sm:$0xf]
          %1188 = vrot.lane.b32.xlu0 %v1172, 64
          %v1189 = vpop.permute.xlu0 %1188
          %1190 = vrot.lane.b32.xlu0 %v1173, 64
          %v1191 = vpop.permute.xlu0 %1190
          %1192 = vrot.lane.b32.xlu0 %v1174, 64
          %v1193 = vpop.permute.xlu0 %1192
          %1194 = vrot.lane.b32.xlu0 %v1175, 64
          %v1195 = vpop.permute.xlu0 %1194
          %1196 = vrot.lane.b32.xlu0 %v1176, 64
          %v1197 = vpop.permute.xlu0 %1196
          %1198 = vrot.lane.b32.xlu0 %v1177, 64
          %v1199 = vpop.permute.xlu0 %1198
          %1200 = vrot.lane.b32.xlu0 %v1178, 64
          %v1201 = vpop.permute.xlu0 %1200
          %1202 = vrot.lane.b32.xlu0 %v1179, 64
          %v1203 = vpop.permute.xlu0 %1202
          %v1212 = vadd.f32 %v1172, %v1189
          %v1213 = vadd.f32 %v1173, %v1191
          %v1214 = vadd.f32 %v1174, %v1193
          %v1215 = vadd.f32 %v1175, %v1195
          %v1216 = vadd.f32 %v1176, %v1197
          %v1217 = vadd.f32 %v1177, %v1199
          %v1218 = vadd.f32 %v1178, %v1201
          %v1219 = vadd.f32 %v1179, %v1203
          %v1220 = vmul.f32 %v1212, 0.015625
          %v1221 = vmul.f32 %v1213, 0.015625
          %v1222 = vmul.f32 %v1214, 0.015625
          %v1223 = vmul.f32 %v1215, 0.015625
          %v1224 = vmul.f32 %v1216, 0.015625
          %v1225 = vmul.f32 %v1217, 0.015625
          %v1226 = vmul.f32 %v1218, 0.015625
          %v1227 = vmul.f32 %v1219, 0.015625
          %v1236 = vrot.slane %v1220, 1
          %v1237 = vrot.slane %v1221, 1
          %v1238 = vrot.slane %v1222, 1
          %v1239 = vrot.slane %v1223, 1
          %v1240 = vrot.slane %v1224, 1
          %v1241 = vrot.slane %v1225, 1
          %v1242 = vrot.slane %v1226, 1
          %v1243 = vrot.slane %v1227, 1
          %1244 = vrot.lane.b32.xlu0 %v1236, 96
          %v1245 = vpop.permute.xlu0 %1244
          %1246 = vrot.lane.b32.xlu0 %v1237, 96
          %v1247 = vpop.permute.xlu0 %1246
          %1248 = vrot.lane.b32.xlu0 %v1238, 96
          %v1249 = vpop.permute.xlu0 %1248
          %1250 = vrot.lane.b32.xlu0 %v1239, 96
          %v1251 = vpop.permute.xlu0 %1250
          %1252 = vrot.lane.b32.xlu0 %v1240, 96
          %v1253 = vpop.permute.xlu0 %1252
          %1254 = vrot.lane.b32.xlu0 %v1241, 96
          %v1255 = vpop.permute.xlu0 %1254
          %1256 = vrot.lane.b32.xlu0 %v1242, 96
          %v1257 = vpop.permute.xlu0 %1256
          %1258 = vrot.lane.b32.xlu0 %v1243, 96
          %v1259 = vpop.permute.xlu0 %1258
          %v1268 = vsub.f32 %v1220, %v1245
          %v1269 = vsub.f32 %v1221, %v1247
          %v1270 = vsub.f32 %v1222, %v1249
          %v1271 = vsub.f32 %v1223, %v1251
          %v1272 = vsub.f32 %v1224, %v1253
          %v1273 = vsub.f32 %v1225, %v1255
          %v1274 = vsub.f32 %v1226, %v1257
          %v1275 = vsub.f32 %v1227, %v1259
          %v1276 = vand.u32 2147483647, %v1268
          %v1277 = vand.u32 2147483647, %v1269
          %v1278 = vand.u32 2147483647, %v1270
          %v1279 = vand.u32 2147483647, %v1271
          %v1280 = vand.u32 2147483647, %v1272
          %v1281 = vand.u32 2147483647, %v1273
          %v1282 = vand.u32 2147483647, %v1274
          %v1283 = vand.u32 2147483647, %v1275
          %v1284 = vmul.f32 %v1220, %v1245
          %v1285 = vmul.f32 %v1221, %v1247
          %v1286 = vmul.f32 %v1222, %v1249
          %v1287 = vmul.f32 %v1223, %v1251
          %v1288 = vmul.f32 %v1224, %v1253
          %v1289 = vmul.f32 %v1225, %v1255
          %v1290 = vmul.f32 %v1226, %v1257
          %v1291 = vmul.f32 %v1227, %v1259
          %v1300 = vsub.f32 %v1220, %v1236
          %v1301 = vsub.f32 %v1221, %v1237
          %v1302 = vsub.f32 %v1222, %v1238
          %v1303 = vsub.f32 %v1223, %v1239
          %v1304 = vsub.f32 %v1224, %v1240
          %v1305 = vsub.f32 %v1225, %v1241
          %v1306 = vsub.f32 %v1226, %v1242
          %v1307 = vsub.f32 %v1227, %v1243
          %v1308 = vand.u32 2147483647, %v1300
          %v1309 = vand.u32 2147483647, %v1301
          %v1310 = vand.u32 2147483647, %v1302
          %v1311 = vand.u32 2147483647, %v1303
          %v1312 = vand.u32 2147483647, %v1304
          %v1313 = vand.u32 2147483647, %v1305
          %v1314 = vand.u32 2147483647, %v1306
          %v1315 = vand.u32 2147483647, %v1307
          %v1316 = vmul.f32 %v1220, %v1236
          %v1317 = vmul.f32 %v1221, %v1237
          %v1318 = vmul.f32 %v1222, %v1238
          %v1319 = vmul.f32 %v1223, %v1239
          %v1320 = vmul.f32 %v1224, %v1240
          %v1321 = vmul.f32 %v1225, %v1241
          %v1322 = vmul.f32 %v1226, %v1242
          %v1323 = vmul.f32 %v1227, %v1243
          %v1324 = vrot.slane %v1221, 7
          %vm1325 = vcmask 1042434
          %v1326 = vsel %vm1325, %v1324, %v1220
          %v1327 = vrot.slane %v1222, 6
          %vm1328 = vcmask 1043459
          %v1329 = vsel %vm1328, %v1327, %v1326
          %v1330 = vrot.slane %v1223, 5
          %vm1331 = vcmask 1044484
          %v1332 = vsel %vm1331, %v1330, %v1329
          %v1333 = vrot.slane %v1224, 4
          %vm1334 = vcmask 1045509
          %v1335 = vsel %vm1334, %v1333, %v1332
          %v1336 = vrot.slane %v1225, 3
          %vm1337 = vcmask 1046534
          %v1338 = vsel %vm1337, %v1336, %v1335
          %v1339 = vrot.slane %v1226, 2
          %vm1340 = vcmask 1047559
          %v1341 = vsel %vm1340, %v1339, %v1338
          %v1343 = vsel %vm1325, %v1221, %v1236
          %v1344 = vrot.slane %v1222, 7
          %v1345 = vsel %vm1328, %v1344, %v1343
          %v1346 = vrot.slane %v1223, 6
          %v1347 = vsel %vm1331, %v1346, %v1345
          %v1348 = vrot.slane %v1224, 5
          %v1349 = vsel %vm1334, %v1348, %v1347
          %v1350 = vrot.slane %v1225, 4
          %v1351 = vsel %vm1337, %v1350, %v1349
          %v1352 = vrot.slane %v1226, 3
          %v1353 = vsel %vm1340, %v1352, %v1351
          %v1354 = vrot.slane %v1227, 2
          %v1365 = vrot.slane %v1277, 7
          %v1366 = vsel %vm1325, %v1365, %v1276
          %v1367 = vrot.slane %v1278, 6
          %v1368 = vsel %vm1328, %v1367, %v1366
          %v1369 = vrot.slane %v1279, 5
          %v1370 = vsel %vm1331, %v1369, %v1368
          %v1371 = vrot.slane %v1280, 4
          %v1372 = vsel %vm1334, %v1371, %v1370
          %v1373 = vrot.slane %v1281, 3
          %v1374 = vsel %vm1337, %v1373, %v1372
          %v1375 = vrot.slane %v1282, 2
          %v1376 = vsel %vm1340, %v1375, %v1374
          %v1377 = vrot.slane %v1283, 1
          %1378 = vrot.lane.b32.xlu0 %v1376, 64
          %v1379 = vpop.permute.xlu0 %1378
          %1380 = vrot.lane.b32.xlu0 %v1377, 64
          %v1381 = vpop.permute.xlu0 %1380
          %v1392 = vrot.slane %v1285, 7
          %v1393 = vsel %vm1325, %v1392, %v1284
          %v1394 = vrot.slane %v1286, 6
          %v1395 = vsel %vm1328, %v1394, %v1393
          %v1396 = vrot.slane %v1287, 5
          %v1397 = vsel %vm1331, %v1396, %v1395
          %v1398 = vrot.slane %v1288, 4
          %v1399 = vsel %vm1334, %v1398, %v1397
          %v1400 = vrot.slane %v1289, 3
          %v1401 = vsel %vm1337, %v1400, %v1399
          %v1402 = vrot.slane %v1290, 2
          %v1403 = vsel %vm1340, %v1402, %v1401
          %v1404 = vrot.slane %v1291, 1
          %1405 = vrot.lane.b32.xlu0 %v1403, 96
          %v1406 = vpop.permute.xlu0 %1405
          %1407 = vrot.lane.b32.xlu0 %v1404, 96
          %v1408 = vpop.permute.xlu0 %1407
          %v1411 = vrot.slane %v1220, 7
          %v1412 = vrot.slane %v1221, 6
          %v1413 = vsel %vm1325, %v1412, %v1411
          %v1414 = vrot.slane %v1222, 5
          %v1415 = vsel %vm1328, %v1414, %v1413
          %v1416 = vrot.slane %v1223, 4
          %v1417 = vsel %vm1331, %v1416, %v1415
          %v1418 = vrot.slane %v1224, 3
          %v1419 = vsel %vm1334, %v1418, %v1417
          %v1420 = vrot.slane %v1225, 2
          %v1421 = vsel %vm1337, %v1420, %v1419
          %v1422 = vsel %vm1340, %v1242, %v1421
          %1425 = vrot.lane.b32.xlu0 %v1341, 32
          %v1426 = vpop.permute.xlu0 %1425
          %1427 = vrot.lane.b32.xlu0 %v1243, 32
          %v1428 = vpop.permute.xlu0 %1427
          %v1439 = vrot.slane %v1308, 7
          %v1440 = vrot.slane %v1309, 6
          %v1441 = vsel %vm1325, %v1440, %v1439
          %v1442 = vrot.slane %v1310, 5
          %v1443 = vsel %vm1328, %v1442, %v1441
          %v1444 = vrot.slane %v1311, 4
          %v1445 = vsel %vm1331, %v1444, %v1443
          %v1446 = vrot.slane %v1312, 3
          %v1447 = vsel %vm1334, %v1446, %v1445
          %v1448 = vrot.slane %v1313, 2
          %v1449 = vsel %vm1337, %v1448, %v1447
          %v1450 = vrot.slane %v1314, 1
          %v1451 = vsel %vm1340, %v1450, %v1449
          %1452 = vrot.lane.b32.xlu0 %v1451, 64
          %v1453 = vpop.permute.xlu0 %1452
          %1454 = vrot.lane.b32.xlu0 %v1315, 64
          %v1455 = vpop.permute.xlu0 %1454
          %v1466 = vrot.slane %v1316, 7
          %v1467 = vrot.slane %v1317, 6
          %v1468 = vsel %vm1325, %v1467, %v1466
          %v1469 = vrot.slane %v1318, 5
          %v1470 = vsel %vm1328, %v1469, %v1468
          %v1471 = vrot.slane %v1319, 4
          %v1472 = vsel %vm1331, %v1471, %v1470
          %v1473 = vrot.slane %v1320, 3
          %v1474 = vsel %vm1334, %v1473, %v1472
          %v1475 = vrot.slane %v1321, 2
          %v1476 = vsel %vm1337, %v1475, %v1474
          %v1477 = vrot.slane %v1322, 1
          %v1478 = vsel %vm1340, %v1477, %v1476
          %1479 = vrot.lane.b32.xlu0 %v1478, 96
          %v1480 = vpop.permute.xlu0 %1479
          %1481 = vrot.lane.b32.xlu0 %v1323, 96
          %v1482 = vpop.permute.xlu0 %1481
          %v1485 = vrot.slane %v1220, 2
          %v1486 = vsel %vm1325, %v1237, %v1485
          %v1487 = vsel %vm1328, %v1222, %v1486
          %v1488 = vrot.slane %v1223, 7
          %v1489 = vsel %vm1331, %v1488, %v1487
          %v1490 = vrot.slane %v1224, 6
          %v1491 = vsel %vm1334, %v1490, %v1489
          %v1492 = vrot.slane %v1225, 5
          %v1493 = vsel %vm1337, %v1492, %v1491
          %v1494 = vrot.slane %v1226, 4
          %v1495 = vsel %vm1340, %v1494, %v1493
          %v1496 = vrot.slane %v1227, 3
          %1497 = vrot.lane.b32.xlu0 %v1495, 96
          %v1498 = vpop.permute.xlu0 %1497
          %1499 = vrot.lane.b32.xlu0 %v1496, 96
          %v1500 = vpop.permute.xlu0 %1499
          %v1501 = vsel %vm724, %v1341, %v1353
          %v1502 = vsel %vm724, %v1243, %v1354
          %vm1503 = vcmask 523264
          %v1504 = vsel %vm1503, %v1501, %v1379
          %v1505 = vsel %vm1503, %v1502, %v1381
          %vm1506 = vcmask 785408
          %v1507 = vsel %vm1506, %v1504, %v1406
          %v1508 = vsel %vm1506, %v1505, %v1408
          %v1509 = vsel %vm724, %v1422, %v1426
          %v1510 = vsel %vm724, %v1227, %v1428
          %v1511 = vsel %vm1503, %v1509, %v1453
          %v1512 = vsel %vm1503, %v1510, %v1455
          %v1513 = vsel %vm1506, %v1511, %v1480
          %v1514 = vsel %vm1506, %v1512, %v1482
          %v1515 = vld [vmem:[#allocation9] sm:$0xff]
          %v1516 = vld [vmem:[#allocation9 + $0x8] sm:$0xff]
          %v1517 = vld [vmem:[#allocation9 + $0x10] sm:$0xff]
          %v1518 = vld [vmem:[#allocation9 + $0x18] sm:$0xff]
          %v1519 = vld [vmem:[#allocation9 + $0x20] sm:$0xff]
          %v1520 = vld [vmem:[#allocation9 + $0x28] sm:$0xff]
          %v1521 = vld [vmem:[#allocation9 + $0x30] sm:$0xff]
          %v1522 = vld [vmem:[#allocation9 + $0x38] sm:$0xff]
          %v1523 = vld [vmem:[#allocation9 + $0x40] sm:$0xff]
          %v1524 = vld [vmem:[#allocation9 + $0x48] sm:$0xff]
          %v1525 = vld [vmem:[#allocation9 + $0x50] sm:$0xff]
          %v1526 = vld [vmem:[#allocation9 + $0x58] sm:$0xff]
          %v1527 = vld [vmem:[#allocation9 + $0x60] sm:$0xff]
          %v1528 = vld [vmem:[#allocation9 + $0x68] sm:$0xff]
          %v1529 = vld [vmem:[#allocation9 + $0x70] sm:$0xff]
          %v1530 = vld [vmem:[#allocation9 + $0x78] sm:$0xff]
          %v1531 = vld [vmem:[#allocation9 + $0x80] sm:$0xff]
          %v1532 = vld [vmem:[#allocation9 + $0x88] sm:$0xff]
          %v1533 = vld [vmem:[#allocation9 + $0x90] sm:$0xff]
          %v1534 = vld [vmem:[#allocation9 + $0x98] sm:$0xff]
          %v1535 = vld [vmem:[#allocation9 + $0xa0] sm:$0xff]
          %v1536 = vld [vmem:[#allocation9 + $0xa8] sm:$0xff]
          %v1537 = vld [vmem:[#allocation9 + $0xb0] sm:$0xff]
          %v1538 = vld [vmem:[#allocation9 + $0xb8] sm:$0xff]
          %v1539 = vld [vmem:[#allocation9 + $0xc0] sm:$0xff]
          %v1540 = vld [vmem:[#allocation9 + $0xc8] sm:$0xff]
          %v1541 = vld [vmem:[#allocation9 + $0xd0] sm:$0xff]
          %v1542 = vld [vmem:[#allocation9 + $0xd8] sm:$0xff]
          %v1543 = vld [vmem:[#allocation9 + $0xe0] sm:$0xff]
          %v1544 = vld [vmem:[#allocation9 + $0xe8] sm:$0xff]
          %v1545 = vld [vmem:[#allocation9 + $0xf0] sm:$0xff]
          %v1546 = vld [vmem:[#allocation9 + $0xf8] sm:$0xff]
          %v1547 = vld [vmem:[#allocation9 + $0x100] sm:$0xff]
          %v1548 = vld [vmem:[#allocation9 + $0x108] sm:$0xff]
          %v1549 = vld [vmem:[#allocation9 + $0x110] sm:$0xff]
          %v1550 = vld [vmem:[#allocation9 + $0x118] sm:$0xff]
          %v1551 = vld [vmem:[%s4] sm:$0x1]
          %v1553 = vlaneseq
          %v1554 = vshrl.u32 %v1553, 7
          %v1555 = vsub.s32 0, %v1554
          %v1556 = vrot.slane %v1551, %v1555
          %vm1562 = vcmask 1046528
          %v1563 = vrot.slane %v1507, 1
          %v1564 = vrot.slane %v1508, 1
          %v1565 = vsel %vm1562, %v1563, %v1564
          %v1566 = vrot.slane %v1513, 1
          %v1567 = vrot.slane %v1514, 1
          %v1568 = vsel %vm1562, %v1566, %v1567
          %v1569 = vrot.slane %v1498, 1
          %v1570 = vrot.slane %v1500, 1
          %v1571 = vsel %vm1562, %v1569, %v1570
          %v1574 = vsel %vm724, %v1571, 0
          %1576 = vmatprep.subr.mxu0 0.0
          %1577 = vmatpush1.msra.mxu0 %v1530
          %1578 = vmatprep.subr.mxu0 0.0
          %1579 = vmatpush1.msra.mxu0 %v1529
          %1580 = vmatprep.subr.mxu0 0.0
          %1581 = vmatpush1.msra.mxu0 %v1528
          %1582 = vmatprep.subr.mxu0 0.0
          %1583 = vmatpush1.msra.mxu0 %v1527
          %1584 = vmatprep.subr.mxu0 0.0
          %1585 = vmatpush1.msra.mxu0 %v1526
          %1586 = vmatprep.subr.mxu0 0.0
          %1587 = vmatpush1.msra.mxu0 %v1525
          %1588 = vmatprep.subr.mxu0 0.0
          %1589 = vmatpush1.msra.mxu0 %v1524
          %1590 = vmatprep.subr.mxu0 0.0
          %1591 = vmatpush1.msra.mxu0 %v1523
          %1592 = vmatprep.subr.mxu0 0.0
          %1593 = vmatpush1.msra.mxu0 %v1522
          %1594 = vmatprep.subr.mxu0 0.0
          %1595 = vmatpush1.msra.mxu0 %v1521
          %1596 = vmatprep.subr.mxu0 0.0
          %1597 = vmatpush1.msra.mxu0 %v1520
          %1598 = vmatprep.subr.mxu0 0.0
          %1599 = vmatpush1.msra.mxu0 %v1519
          %1600 = vmatprep.subr.mxu0 0.0
          %1601 = vmatpush1.msra.mxu0 %v1518
          %1602 = vmatprep.subr.mxu0 0.0
          %1603 = vmatpush1.msra.mxu0 %v1517
          %1604 = vmatprep.subr.mxu0 0.0
          %1605 = vmatpush1.msra.mxu0 %v1516
          %1606 = vmatprep.subr.mxu0 0.0
          %1607 = vmatpush1.msra.mxu0 %v1515
          %1608 = vmatprep.subr.mxu0 0.0
          %1609 = vmatpush2.msra.mxu0 %v1546
          %1610 = vmatprep.subr.mxu0 0.0
          %1611 = vmatpush2.msra.mxu0 %v1545
          %1612 = vmatprep.subr.mxu0 0.0
          %1613 = vmatpush2.msra.mxu0 %v1544
          %1614 = vmatprep.subr.mxu0 0.0
          %1615 = vmatpush2.msra.mxu0 %v1543
          %1616 = vmatprep.subr.mxu0 0.0
          %1617 = vmatpush2.msra.mxu0 %v1542
          %1618 = vmatprep.subr.mxu0 0.0
          %1619 = vmatpush2.msra.mxu0 %v1541
          %1620 = vmatprep.subr.mxu0 0.0
          %1621 = vmatpush2.msra.mxu0 %v1540
          %1622 = vmatprep.subr.mxu0 0.0
          %1623 = vmatpush2.msra.mxu0 %v1539
          %1624 = vmatprep.subr.mxu0 0.0
          %1625 = vmatpush2.msra.mxu0 %v1538
          %1626 = vmatprep.subr.mxu0 0.0
          %1627 = vmatpush2.msra.mxu0 %v1537
          %1628 = vmatprep.subr.mxu0 0.0
          %1629 = vmatpush2.msra.mxu0 %v1536
          %1630 = vmatprep.subr.mxu0 0.0
          %1631 = vmatpush2.msra.mxu0 %v1535
          %1632 = vmatprep.subr.mxu0 0.0
          %1633 = vmatpush2.msra.mxu0 %v1534
          %1634 = vmatprep.subr.mxu0 0.0
          %1635 = vmatpush2.msra.mxu0 %v1533
          %1636 = vmatprep.subr.mxu0 0.0
          %1637 = vmatpush2.msra.mxu0 %v1532
          %1638 = vmatprep.subr.mxu0 0.0
          %1639 = vmatpush2.msra.mxu0 %v1531
          %1640 = vmatprep.mubr.f32.mxu0 %v1568
          %1641 = vmatmul.mubr.f32.gmra.mxu0 %v1565
          %v1642 = vpop.f32.mrf.mxu0
          %v1643 = vadd.f32 %v1556, %v1642
          %v1644 = vpop.f32.mrf.mxu0
          %1645 = vdwg.mxu0
          %1646 = vmatprep.subr.mxu0 0.0
          %1647 = vmatpush1.msra.mxu0 0.0
          %1648 = vmatprep.subr.mxu0 0.0
          %1649 = vmatpush1.msra.mxu0 0.0
          %1650 = vmatprep.subr.mxu0 0.0
          %1651 = vmatpush1.msra.mxu0 0.0
          %1652 = vmatprep.subr.mxu0 0.0
          %1653 = vmatpush1.msra.mxu0 0.0
          %1654 = vmatprep.subr.mxu0 0.0
          %1655 = vmatpush1.msra.mxu0 0.0
          %1656 = vmatprep.subr.mxu0 0.0
          %1657 = vmatpush1.msra.mxu0 0.0
          %1658 = vmatprep.subr.mxu0 0.0
          %1659 = vmatpush1.msra.mxu0 0.0
          %1660 = vmatprep.subr.mxu0 0.0
          %1661 = vmatpush1.msra.mxu0 0.0
          %1662 = vmatprep.subr.mxu0 0.0
          %1663 = vmatpush1.msra.mxu0 0.0
          %1664 = vmatprep.subr.mxu0 0.0
          %1665 = vmatpush1.msra.mxu0 0.0
          %1666 = vmatprep.subr.mxu0 0.0
          %1667 = vmatpush1.msra.mxu0 0.0
          %1668 = vmatprep.subr.mxu0 0.0
          %1669 = vmatpush1.msra.mxu0 0.0
          %1670 = vmatprep.subr.mxu0 0.0
          %1671 = vmatpush1.msra.mxu0 %v1550
          %1672 = vmatprep.subr.mxu0 0.0
          %1673 = vmatpush1.msra.mxu0 %v1549
          %1674 = vmatprep.subr.mxu0 0.0
          %1675 = vmatpush1.msra.mxu0 %v1548
          %1676 = vmatprep.subr.mxu0 0.0
          %1677 = vmatpush1.msra.mxu0 %v1547
          %1678 = vmatprep.subr.mxu0 0.0
          %1679 = vmatpush2.msra.mxu0 0.0
          %1680 = vmatprep.subr.mxu0 0.0
          %1681 = vmatpush2.msra.mxu0 0.0
          %1682 = vmatprep.subr.mxu0 0.0
          %1683 = vmatpush2.msra.mxu0 0.0
          %1684 = vmatprep.subr.mxu0 0.0
          %1685 = vmatpush2.msra.mxu0 0.0
          %1686 = vmatprep.subr.mxu0 0.0
          %1687 = vmatpush2.msra.mxu0 0.0
          %1688 = vmatprep.subr.mxu0 0.0
          %1689 = vmatpush2.msra.mxu0 0.0
          %1690 = vmatprep.subr.mxu0 0.0
          %1691 = vmatpush2.msra.mxu0 0.0
          %1692 = vmatprep.subr.mxu0 0.0
          %1693 = vmatpush2.msra.mxu0 0.0
          %1694 = vmatprep.subr.mxu0 0.0
          %1695 = vmatpush2.msra.mxu0 0.0
          %1696 = vmatprep.subr.mxu0 0.0
          %1697 = vmatpush2.msra.mxu0 0.0
          %1698 = vmatprep.subr.mxu0 0.0
          %1699 = vmatpush2.msra.mxu0 0.0
          %1700 = vmatprep.subr.mxu0 0.0
          %1701 = vmatpush2.msra.mxu0 0.0
          %1702 = vmatprep.subr.mxu0 0.0
          %1703 = vmatpush2.msra.mxu0 0.0
          %1704 = vmatprep.subr.mxu0 0.0
          %1705 = vmatpush2.msra.mxu0 0.0
          %1706 = vmatprep.subr.mxu0 0.0
          %1707 = vmatpush2.msra.mxu0 0.0
          %1708 = vmatprep.subr.mxu0 0.0
          %1709 = vmatpush2.msra.mxu0 0.0
          %1710 = vmatprep.mubr.f32.mxu0 0.0
          %1711 = vmatmul.mubr.f32.gmra.mxu0 %v1574
          %v1712 = vpop.f32.mrf.mxu0
          %v1713 = vadd.f32 %v1643, %v1712
          %v1714 = vpop.f32.mrf.mxu0
          %1715 = vdwg.mxu0
          %1716 = vst [vmem:[%s351] sm:$0xff] %v1713
        $region64: #{tpu_custom_call.1} parent=39 // pred_fallthru
          _
        %s1717 = sand.u32 %s172, 1
        %s1718 = scalar_lea.sflag [#allocation5], %s1717
        %s1719 = sand.u32 %s172, 1
        %s1720 = smul.addr %s1719, 8
        %s1721 = scalar_lea.vmem [#allocation11], %s1720
        // Predicated region
        $region65: #{tpu_custom_call.1} parent=39 // pred_check
          %p1722 = pneg %p182
        $region66: #{tpu_custom_call.1} parent=39 // pred_check_branch
          %1724 = sbr.rel (%p1722) target = $region68
        $region67: #{tpu_custom_call.1} parent=39 // pred_region
          %s1726 = ssub.s32 128, 128
          %1727 = vsyncadd %s1718, %s1726
          %s1728 = smul.addr %s30, 128
          %s1729 = scalar_lea.hbm %s5, %s1728
          %s1731 = sshll.u32 %s1721, 4
          %s1732 = int_to_ptr.vmem [resolvable:$true] %s1731
          %1734 = dma.vmem_to_hbm [thread:$0]  %s1732, 128, %s1729, %s1718
        $region68: #{tpu_custom_call.1} parent=39 // pred_fallthru
          _
      $region40: #{tpu_custom_call.1} parent=5 // pred_fallthru
        _
      %p1735 = scmp.le.s32.totalorder 2, %s21
      // Predicated region
      $region69: #{tpu_custom_call.1} parent=5 // pred_check
        %p1736 = pneg %p1735
      $region70: #{tpu_custom_call.1} parent=5 // pred_check_branch
        %1738 = sbr.rel (%p1736) target = $region72
      $region71: #{tpu_custom_call.1} parent=5 // pred_region
        %s1739 = ssub.s32 %s21, 2
        // Predicated region
        $region73: #{tpu_custom_call.1} parent=71 // pred_check
          %p1740 = pneg %p188
        $region74: #{tpu_custom_call.1} parent=71 // pred_check_branch
          %1742 = sbr.rel (%p1740) target = $region76
        $region75: #{tpu_custom_call.1} parent=71 // pred_region
          %s1743 = sand.u32 %s173, 1
          %s1744 = scalar_lea.sflag [#allocation5], %s1743
          %s1745 = sand.u32 %s173, 1
          %s1746 = smul.addr %s1745, 8
          %s1747 = scalar_lea.vmem [#allocation11], %s1746
          %1748 = dma.done %s1744, 128
        $region76: #{tpu_custom_call.1} parent=71 // pred_fallthru
          _
      $region72: #{tpu_custom_call.1} parent=5 // pred_fallthru
        _
    $region6: #{tpu_custom_call.1} parent=1 // loop_footer
      %s25 = sadd.s32 1, %s21
    $region7: #{tpu_custom_call.1} parent=1 // loop_footer_branch
      %20 = sbr.rel target = $region3
    $region8: #{tpu_custom_call.1} parent=1 // loop_exit
      _
    %1749 = vsyncpa [#allocation4], 1
    %s1750 = scalar_lea.sflag [#allocation4], 1
    %1751 = vsyncpa %s1750, 1
    %1752 = vsyncpa [#allocation7], 1
    %s1753 = scalar_lea.sflag [#allocation7], 1
    %1754 = vsyncpa %s1753, 1
    %1755 = vsyncpa [#allocation10], 1
    %1756 = vsyncpa [#allocation5], 1
    %s1757 = scalar_lea.sflag [#allocation5], 1
    %1758 = vsyncpa %s1757, 1

</llo_original>
